<compile_context>
chip_gen: v7x
topology: tpu7x:2x2x1
jax: 0.10.0
libtpu: 0.0.40
codegen_flags: <defaults>
</compile_context>

<pallas_src>
from functools import partial

import jax
import jax.numpy as jnp
from jax.experimental import pallas as pl
from jax.experimental.pallas import tpu as pltpu


def _pad_to(n, m):
    return max(m, ((n + m - 1) // m) * m)


# ----------------------------------------------------------------------------
# Pallas kernel
# ----------------------------------------------------------------------------
def actor_kernel(state_ref, other_flat_ref,
                 w_ih_ref, w_hh_ref, b_lstm_ref,
                 w1s_ref, w1h_ref, b1_ref,
                 w2_ref, b2_ref, w3_ref, b3_ref,
                 out_ref):
    B = state_ref.shape[0]                 # padded batch (multiple of 8 sublanes)
    H = w_hh_ref.shape[0]
    T = other_flat_ref.shape[0] // B       # static trip count

    # ---- Hoisted, recurrence-independent work (MXU is otherwise idle during
    #      the EUP-bound recurrence; issuing these first hides them) ----------
    # (a) input projection for every timestep at once, bias folded in:
    #     (T*B, D_other) @ (D_other, 4H) -> (T*B, 4H)
    x_proj = (jnp.dot(other_flat_ref[...], w_ih_ref[...],
                      preferred_element_type=jnp.float32)
              + b_lstm_ref[...])                           # f32 (T*B, 4H)
    # (b) fc1 state branch (does not depend on h); the h branch is added after
    #     the loop.  This replaces the in-kernel concat([state, h]).
    x_state = (jnp.dot(state_ref[...], w1s_ref[...],
                       preferred_element_type=jnp.float32)
               + b1_ref[...])                              # f32 (B, fc1_pad)

    # Lane mask / lane-constant scale for the single-tanh gate activation:
    # tanh(x) on the g lanes [2H, 3H), sigmoid(x) = 0.5*(1 + tanh(x/2)) on i/f/o.
    lane = jax.lax.broadcasted_iota(jnp.int32, (B, 4 * H), 1)
    g_mask = (lane >= 2 * H) & (lane < 3 * H)
    alpha = jnp.where(g_mask, 1.0, 0.5)                    # f32 (B, 4H)

    w_hh = w_hh_ref[...]                                   # (H, 4H) bf16

    h = jnp.zeros((B, H), jnp.float32)
    c = jnp.zeros((B, H), jnp.float32)

    # ---- Fully unrolled recurrence (T is a static Python int).
    #      TODO(synk): switch to lax.fori_loop(..., unroll=4..8) if T > ~32.
    for t in range(T):
        xp_t = x_proj[t * B:(t + 1) * B, :]                # (B, 4H) static, 8-row aligned
        gates = xp_t + jnp.dot(h.astype(w_hh.dtype), w_hh,
                               preferred_element_type=jnp.float32)
        # ONE transcendental pass over the whole (B, 4H) vreg per step.
        tt = jnp.tanh(alpha * gates)
        act = jnp.where(g_mask, tt, 0.5 * tt + 0.5)
        i = act[:, 0:H]
        f = act[:, H:2 * H]
        g = act[:, 2 * H:3 * H]
        o = act[:, 3 * H:4 * H]
        c = f * c + i * g
        h = o * jnp.tanh(c)

    # ---- MLP head (all widths lane-padded to 128 -> unmasked ops) ----------
    x = x_state + jnp.dot(h.astype(w1h_ref.dtype), w1h_ref[...],
                          preferred_element_type=jnp.float32)
    x = jnp.maximum(x, 0.01 * x)                           # leaky_relu(0.01)

    x = jnp.dot(x.astype(w2_ref.dtype), w2_ref[...],
                preferred_element_type=jnp.float32) + b2_ref[...]
    x = jnp.maximum(x, 0.01 * x)

    p = jnp.dot(x.astype(w3_ref.dtype), w3_ref[...],
                preferred_element_type=jnp.float32) + b3_ref[...]
    # softsign (exact divide keeps |out| <= 1 bit-exactly)
    out_ref[...] = p / (1.0 + jnp.abs(p))


# ----------------------------------------------------------------------------
# Wrapper
# ----------------------------------------------------------------------------
@partial(jax.jit, static_argnames=("n_actions",))
def actor_forward(state, other_state, kparams, n_actions):
    """state: (B, state_dim) f32; other_state: (B, T, other_state_dim) f32 (batch_first)."""
    B, state_dim = state.shape
    _, T, d_other = other_state.shape
    n_pad = kparams["w_pi"].shape[1]       # lane-padded action width (>=128)

    # Minimal wrapper plumbing: cast to bf16 first (half the bytes), then pad
    # the batch to a sublane multiple (>=8) and time-major flatten so the
    # hoisted input projection is a single matmul and each timestep is a
    # contiguous, 8-row-aligned static slice in the kernel.
    B_pad = _pad_to(B, 8)
    pad_b = B_pad - B
    state_p = jnp.pad(state.astype(jnp.bfloat16), ((0, pad_b), (0, 0)))
    other_flat = jnp.pad(
        jnp.transpose(other_state.astype(jnp.bfloat16), (1, 0, 2)),
        ((0, 0), (0, pad_b), (0, 0)),
    ).reshape(T * B_pad, d_other)

    vmem = pl.BlockSpec(memory_space=pltpu.MemorySpace.VMEM)
    args = (
        state_p,
        other_flat,
        kparams["w_ih"], kparams["w_hh"], kparams["b_lstm"],
        kparams["w_fc1_state"], kparams["w_fc1_h"], kparams["b_fc1"],
        kparams["w_fc2"], kparams["b_fc2"],
        kparams["w_pi"], kparams["b_pi"],
    )
    # Gridless single invocation (<< 1 MiB resident VMEM on all generations).
    # TODO(synk): for production batch sizes on v7x, add a leading batch grid
    # axis with dimension_semantics=("parallel",) to use both TensorCores.
    out_pad = pl.pallas_call(
        actor_kernel,
        out_shape=jax.ShapeDtypeStruct((B_pad, n_pad), jnp.float32),
        in_specs=[vmem] * len(args),
        out_specs=vmem,
    )(*args)
    return out_pad[:B, :n_actions]


# ----------------------------------------------------------------------------
# Parameter construction (PyTorch layout) and kernel-layout preparation
# ----------------------------------------------------------------------------
def init_raw_params(key, state_dim, other_state_dim, hidden_dim,
                    fc1_dims, fc2_dims, n_actions):
    """Deterministic synthetic parameters in PyTorch's native layouts."""
    ks = jax.random.split(key, 10)
    s = 0.1
    return {
        # nn.LSTM: weight_ih (4H, D), weight_hh (4H, H), biases (4H,), gates [i,f,g,o]
        "w_ih": s * jax.random.normal(ks[0], (4 * hidden_dim, other_state_dim), jnp.float32),
        "w_hh": s * jax.random.normal(ks[1], (4 * hidden_dim, hidden_dim), jnp.float32),
        "b_ih": s * jax.random.normal(ks[2], (4 * hidden_dim,), jnp.float32),
        "b_hh": s * jax.random.normal(ks[3], (4 * hidden_dim,), jnp.float32),
        "w_fc1": s * jax.random.normal(ks[4], (fc1_dims, state_dim + hidden_dim), jnp.float32),
        "b_fc1": s * jax.random.normal(ks[5], (fc1_dims,), jnp.float32),
        "w_fc2": s * jax.random.normal(ks[6], (fc2_dims, fc1_dims), jnp.float32),
        "b_fc2": s * jax.random.normal(ks[7], (fc2_dims,), jnp.float32),
        "w_pi": s * jax.random.normal(ks[8], (n_actions, fc2_dims), jnp.float32),
        "b_pi": s * jax.random.normal(ks[9], (n_actions,), jnp.float32),
    }


def prepare_kernel_params(raw, state_dim):
    """Transpose / split / lane-pad / bf16-cast weights for the kernel (x @ W form).

    fc1, fc2 and the action width are zero-padded to 128 lanes so every MLP
    intermediate is lane-dense.  Zero bias/weight padding keeps the padded
    lanes exactly 0 through leaky_relu, so results are unchanged.
    """
    fc1, in1 = raw["w_fc1"].shape
    fc2, _ = raw["w_fc2"].shape
    n_actions, _ = raw["w_pi"].shape
    H = raw["w_hh"].shape[1]

    fc1_p = _pad_to(fc1, 128)
    fc2_p = _pad_to(fc2, 128)
    n_pad = _pad_to(n_actions, 128)

    def pad2(a, rows, cols):
        return jnp.pad(a, ((0, rows - a.shape[0]), (0, cols - a.shape[1])))

    w1s = raw["w_fc1"][:, :state_dim].T          # (state_dim, fc1)
    w1h = raw["w_fc1"][:, state_dim:].T          # (H, fc1)
    w2 = raw["w_fc2"].T                          # (fc1, fc2)
    w3 = raw["w_pi"].T                           # (fc2, n_actions)

    bf = jnp.bfloat16
    return {
        "w_ih": raw["w_ih"].T.astype(bf),                                  # (D_other, 4H)
        "w_hh": raw["w_hh"].T.astype(bf),                                  # (H, 4H)
        "b_lstm": (raw["b_ih"] + raw["b_hh"]).reshape(1, -1),              # (1, 4H) f32
        "w_fc1_state": pad2(w1s, state_dim, fc1_p).astype(bf),             # (state_dim, fc1_p)
        "w_fc1_h": pad2(w1h, H, fc1_p).astype(bf),                         # (H, fc1_p)
        "b_fc1": pad2(raw["b_fc1"].reshape(1, -1), 1, fc1_p),              # (1, fc1_p) f32
        "w_fc2": pad2(w2, fc1_p, fc2_p).astype(bf),                        # (fc1_p, fc2_p)
        "b_fc2": pad2(raw["b_fc2"].reshape(1, -1), 1, fc2_p),              # (1, fc2_p) f32
        "w_pi": pad2(w3, fc2_p, n_pad).astype(bf),                         # (fc2_p, n_pad)
        "b_pi": pad2(raw["b_pi"].reshape(1, -1), 1, n_pad),                # (1, n_pad) f32
    }


# ----------------------------------------------------------------------------
# Pure-JAX reference (f32, mirrors the PyTorch forward exactly)
# ----------------------------------------------------------------------------
def actor_reference(state, other_state, raw):
    H = raw["w_hh"].shape[1]
    B, T, _ = other_state.shape
    b_lstm = raw["b_ih"] + raw["b_hh"]
    h = jnp.zeros((B, H), jnp.float32)
    c = jnp.zeros((B, H), jnp.float32)
    for t in range(T):
        gates = other_state[:, t, :] @ raw["w_ih"].T + h @ raw["w_hh"].T + b_lstm
        i = jax.nn.sigmoid(gates[:, 0:H])
        f = jax.nn.sigmoid(gates[:, H:2 * H])
        g = jnp.tanh(gates[:, 2 * H:3 * H])
        o = jax.nn.sigmoid(gates[:, 3 * H:4 * H])
        c = f * c + i * g
        h = o * jnp.tanh(c)
    inputs = jnp.concatenate([state, h], axis=1)
    x = inputs @ raw["w_fc1"].T + raw["b_fc1"]
    x = jnp.where(x > 0, x, 0.01 * x)
    x = x @ raw["w_fc2"].T + raw["b_fc2"]
    x = jnp.where(x > 0, x, 0.01 * x)
    p = x @ raw["w_pi"].T + raw["b_pi"]
    return p / (1.0 + jnp.abs(p))


# ----------------------------------------------------------------------------
# Main
# ----------------------------------------------------------------------------
if __name__ == "__main__":
    # Small shapes consistent with the module's forward
    B, T = 4, 8
    state_dim, other_state_dim = 12, 6
    hidden_dim, fc1_dims, fc2_dims, n_actions = 32, 64, 64, 4

    key = jax.random.PRNGKey(0)
    k_state, k_other, k_params = jax.random.split(key, 3)

    state = jax.random.normal(k_state, (B, state_dim), jnp.float32)
    other_state = jax.random.normal(k_other, (B, T, other_state_dim), jnp.float32)

    raw = init_raw_params(k_params, state_dim, other_state_dim,
                          hidden_dim, fc1_dims, fc2_dims, n_actions)
    kparams = prepare_kernel_params(raw, state_dim)

    pi = actor_forward(state, other_state, kparams, n_actions)
    jax.block_until_ready(pi)

    assert pi.shape == (B, n_actions)
    assert bool(jnp.all(jnp.isfinite(pi)))
    assert bool(jnp.all(jnp.abs(pi) <= 1.0))          # softsign range (exact divide)

    # Correctness vs the f32 PyTorch-semantics reference (bf16 matmuls + the
    # sigmoid-via-tanh identity -> loose tolerance)
    pi_ref = actor_reference(state, other_state, raw)
    assert bool(jnp.all(jnp.abs(pi - pi_ref) < 5e-2)), "mismatch vs reference"

    print("KERNEL_OK")
</pallas_src>

<mosaic_0001>
module attributes {stable_mosaic.version = 11 : i64} {
  func.func @actor_kernel(%arg0: memref<8x12xbf16, #tpu.memory_space<vmem>>, %arg1: memref<64x6xbf16, #tpu.memory_space<vmem>>, %arg2: memref<6x128xbf16, #tpu.memory_space<vmem>>, %arg3: memref<32x128xbf16, #tpu.memory_space<vmem>>, %arg4: memref<1x128xf32, #tpu.memory_space<vmem>>, %arg5: memref<12x128xbf16, #tpu.memory_space<vmem>>, %arg6: memref<32x128xbf16, #tpu.memory_space<vmem>>, %arg7: memref<1x128xf32, #tpu.memory_space<vmem>>, %arg8: memref<128x128xbf16, #tpu.memory_space<vmem>>, %arg9: memref<1x128xf32, #tpu.memory_space<vmem>>, %arg10: memref<128x128xbf16, #tpu.memory_space<vmem>>, %arg11: memref<1x128xf32, #tpu.memory_space<vmem>>, %arg12: memref<8x128xf32, #tpu.memory_space<vmem>>) attributes {dimension_semantics = [], scalar_prefetch = 0 : i64, scratch_operands = 0 : i64, tpu.core_type = #tpu.core_type<tc>} {
    %c0 = arith.constant 0 : index
    %c0_0 = arith.constant 0 : index
    %0 = vector.load %arg1[%c0, %c0_0] : memref<64x6xbf16, #tpu.memory_space<vmem>>, vector<64x6xbf16>
    %c0_1 = arith.constant 0 : index
    %c0_2 = arith.constant 0 : index
    %1 = vector.load %arg2[%c0_1, %c0_2] : memref<6x128xbf16, #tpu.memory_space<vmem>>, vector<6x128xbf16>
    %cst = arith.constant dense<0.000000e+00> : vector<64x128xf32>
    %2 = tpu.matmul %0, %1, %cst {dimension_numbers = #tpu.dot_dimension_numbers<[1], [0], [0], [1], [0, 0, 1, 1], [], []>} : vector<64x6xbf16>, vector<6x128xbf16>, vector<64x128xf32> -> vector<64x128xf32>
    %c0_3 = arith.constant 0 : index
    %c0_4 = arith.constant 0 : index
    %3 = vector.load %arg4[%c0_3, %c0_4] : memref<1x128xf32, #tpu.memory_space<vmem>>, vector<1x128xf32>
    %4 = vector.broadcast %3 : vector<1x128xf32> to vector<64x128xf32>
    %5 = arith.addf %2, %4 : vector<64x128xf32>
    %c0_5 = arith.constant 0 : index
    %c0_6 = arith.constant 0 : index
    %6 = vector.load %arg0[%c0_5, %c0_6] : memref<8x12xbf16, #tpu.memory_space<vmem>>, vector<8x12xbf16>
    %c0_7 = arith.constant 0 : index
    %c0_8 = arith.constant 0 : index
    %7 = vector.load %arg5[%c0_7, %c0_8] : memref<12x128xbf16, #tpu.memory_space<vmem>>, vector<12x128xbf16>
    %cst_9 = arith.constant dense<0.000000e+00> : vector<8x128xf32>
    %8 = tpu.matmul %6, %7, %cst_9 {dimension_numbers = #tpu.dot_dimension_numbers<[1], [0], [0], [1], [0, 0, 1, 1], [], []>} : vector<8x12xbf16>, vector<12x128xbf16>, vector<8x128xf32> -> vector<8x128xf32>
    %c0_10 = arith.constant 0 : index
    %c0_11 = arith.constant 0 : index
    %9 = vector.load %arg7[%c0_10, %c0_11] : memref<1x128xf32, #tpu.memory_space<vmem>>, vector<1x128xf32>
    %10 = vector.broadcast %9 : vector<1x128xf32> to vector<8x128xf32>
    %11 = arith.addf %8, %10 : vector<8x128xf32>
    %12 = tpu.iota {dimensions = array<i32: 1>} : vector<8x128xi32>
    %c64_i32 = arith.constant 64 : i32
    %13 = vector.broadcast %c64_i32 : i32 to vector<8x128xi32>
    %14 = arith.cmpi sge, %12, %13 : vector<8x128xi32>
    %c96_i32 = arith.constant 96 : i32
    %15 = vector.broadcast %c96_i32 : i32 to vector<8x128xi32>
    %16 = arith.cmpi slt, %12, %15 : vector<8x128xi32>
    %17 = arith.andi %14, %16 : vector<8x128xi1>
    %cst_12 = arith.constant 1.000000e+00 : f32
    %cst_13 = arith.constant 5.000000e-01 : f32
    %18 = vector.broadcast %cst_12 : f32 to vector<8x128xf32>
    %19 = vector.broadcast %cst_13 : f32 to vector<8x128xf32>
    %20 = arith.select %17, %18, %19 : vector<8x128xi1>, vector<8x128xf32>
    %c0_14 = arith.constant 0 : index
    %c0_15 = arith.constant 0 : index
    %21 = vector.load %arg3[%c0_14, %c0_15] : memref<32x128xbf16, #tpu.memory_space<vmem>>, vector<32x128xbf16>
    %cst_16 = arith.constant 0.000000e+00 : f32
    %22 = vector.broadcast %cst_16 : f32 to vector<8x32xf32>
    %cst_17 = arith.constant 0.000000e+00 : f32
    %23 = vector.broadcast %cst_17 : f32 to vector<8x32xf32>
    %24 = vector.extract_strided_slice %5 {offsets = [0, 0], sizes = [8, 128], strides = [1, 1]} : vector<64x128xf32> to vector<8x128xf32>
    %25 = arith.truncf %22 : vector<8x32xf32> to vector<8x32xbf16>
    %cst_18 = arith.constant dense<0.000000e+00> : vector<8x128xf32>
    %26 = tpu.matmul %25, %21, %cst_18 {dimension_numbers = #tpu.dot_dimension_numbers<[1], [0], [0], [1], [0, 0, 1, 1], [], []>} : vector<8x32xbf16>, vector<32x128xbf16>, vector<8x128xf32> -> vector<8x128xf32>
    %27 = arith.addf %24, %26 : vector<8x128xf32>
    %28 = arith.mulf %20, %27 : vector<8x128xf32>
    %29 = math.tanh %28 : vector<8x128xf32>
    %cst_19 = arith.constant 5.000000e-01 : f32
    %30 = vector.broadcast %cst_19 : f32 to vector<8x128xf32>
    %31 = arith.mulf %30, %29 : vector<8x128xf32>
    %cst_20 = arith.constant 5.000000e-01 : f32
    %32 = vector.broadcast %cst_20 : f32 to vector<8x128xf32>
    %33 = arith.addf %31, %32 : vector<8x128xf32>
    %34 = arith.select %17, %29, %33 : vector<8x128xi1>, vector<8x128xf32>
    %35 = vector.extract_strided_slice %34 {offsets = [0, 0], sizes = [8, 32], strides = [1, 1]} : vector<8x128xf32> to vector<8x32xf32>
    %36 = vector.extract_strided_slice %34 {offsets = [0, 32], sizes = [8, 32], strides = [1, 1]} : vector<8x128xf32> to vector<8x32xf32>
    %37 = vector.extract_strided_slice %34 {offsets = [0, 64], sizes = [8, 32], strides = [1, 1]} : vector<8x128xf32> to vector<8x32xf32>
    %38 = vector.extract_strided_slice %34 {offsets = [0, 96], sizes = [8, 32], strides = [1, 1]} : vector<8x128xf32> to vector<8x32xf32>
    %39 = arith.mulf %36, %23 : vector<8x32xf32>
    %40 = arith.mulf %35, %37 : vector<8x32xf32>
    %41 = arith.addf %39, %40 : vector<8x32xf32>
    %42 = math.tanh %41 : vector<8x32xf32>
    %43 = arith.mulf %38, %42 : vector<8x32xf32>
    %44 = vector.extract_strided_slice %5 {offsets = [8, 0], sizes = [8, 128], strides = [1, 1]} : vector<64x128xf32> to vector<8x128xf32>
    %45 = arith.truncf %43 : vector<8x32xf32> to vector<8x32xbf16>
    %cst_21 = arith.constant dense<0.000000e+00> : vector<8x128xf32>
    %46 = tpu.matmul %45, %21, %cst_21 {dimension_numbers = #tpu.dot_dimension_numbers<[1], [0], [0], [1], [0, 0, 1, 1], [], []>} : vector<8x32xbf16>, vector<32x128xbf16>, vector<8x128xf32> -> vector<8x128xf32>
    %47 = arith.addf %44, %46 : vector<8x128xf32>
    %48 = arith.mulf %20, %47 : vector<8x128xf32>
    %49 = math.tanh %48 : vector<8x128xf32>
    %cst_22 = arith.constant 5.000000e-01 : f32
    %50 = vector.broadcast %cst_22 : f32 to vector<8x128xf32>
    %51 = arith.mulf %50, %49 : vector<8x128xf32>
    %cst_23 = arith.constant 5.000000e-01 : f32
    %52 = vector.broadcast %cst_23 : f32 to vector<8x128xf32>
    %53 = arith.addf %51, %52 : vector<8x128xf32>
    %54 = arith.select %17, %49, %53 : vector<8x128xi1>, vector<8x128xf32>
    %55 = vector.extract_strided_slice %54 {offsets = [0, 0], sizes = [8, 32], strides = [1, 1]} : vector<8x128xf32> to vector<8x32xf32>
    %56 = vector.extract_strided_slice %54 {offsets = [0, 32], sizes = [8, 32], strides = [1, 1]} : vector<8x128xf32> to vector<8x32xf32>
    %57 = vector.extract_strided_slice %54 {offsets = [0, 64], sizes = [8, 32], strides = [1, 1]} : vector<8x128xf32> to vector<8x32xf32>
    %58 = vector.extract_strided_slice %54 {offsets = [0, 96], sizes = [8, 32], strides = [1, 1]} : vector<8x128xf32> to vector<8x32xf32>
    %59 = arith.mulf %56, %41 : vector<8x32xf32>
    %60 = arith.mulf %55, %57 : vector<8x32xf32>
    %61 = arith.addf %59, %60 : vector<8x32xf32>
    %62 = math.tanh %61 : vector<8x32xf32>
    %63 = arith.mulf %58, %62 : vector<8x32xf32>
    %64 = vector.extract_strided_slice %5 {offsets = [16, 0], sizes = [8, 128], strides = [1, 1]} : vector<64x128xf32> to vector<8x128xf32>
    %65 = arith.truncf %63 : vector<8x32xf32> to vector<8x32xbf16>
    %cst_24 = arith.constant dense<0.000000e+00> : vector<8x128xf32>
    %66 = tpu.matmul %65, %21, %cst_24 {dimension_numbers = #tpu.dot_dimension_numbers<[1], [0], [0], [1], [0, 0, 1, 1], [], []>} : vector<8x32xbf16>, vector<32x128xbf16>, vector<8x128xf32> -> vector<8x128xf32>
    %67 = arith.addf %64, %66 : vector<8x128xf32>
    %68 = arith.mulf %20, %67 : vector<8x128xf32>
    %69 = math.tanh %68 : vector<8x128xf32>
    %cst_25 = arith.constant 5.000000e-01 : f32
    %70 = vector.broadcast %cst_25 : f32 to vector<8x128xf32>
    %71 = arith.mulf %70, %69 : vector<8x128xf32>
    %cst_26 = arith.constant 5.000000e-01 : f32
    %72 = vector.broadcast %cst_26 : f32 to vector<8x128xf32>
    %73 = arith.addf %71, %72 : vector<8x128xf32>
    %74 = arith.select %17, %69, %73 : vector<8x128xi1>, vector<8x128xf32>
    %75 = vector.extract_strided_slice %74 {offsets = [0, 0], sizes = [8, 32], strides = [1, 1]} : vector<8x128xf32> to vector<8x32xf32>
    %76 = vector.extract_strided_slice %74 {offsets = [0, 32], sizes = [8, 32], strides = [1, 1]} : vector<8x128xf32> to vector<8x32xf32>
    %77 = vector.extract_strided_slice %74 {offsets = [0, 64], sizes = [8, 32], strides = [1, 1]} : vector<8x128xf32> to vector<8x32xf32>
    %78 = vector.extract_strided_slice %74 {offsets = [0, 96], sizes = [8, 32], strides = [1, 1]} : vector<8x128xf32> to vector<8x32xf32>
    %79 = arith.mulf %76, %61 : vector<8x32xf32>
    %80 = arith.mulf %75, %77 : vector<8x32xf32>
    %81 = arith.addf %79, %80 : vector<8x32xf32>
    %82 = math.tanh %81 : vector<8x32xf32>
    %83 = arith.mulf %78, %82 : vector<8x32xf32>
    %84 = vector.extract_strided_slice %5 {offsets = [24, 0], sizes = [8, 128], strides = [1, 1]} : vector<64x128xf32> to vector<8x128xf32>
    %85 = arith.truncf %83 : vector<8x32xf32> to vector<8x32xbf16>
    %cst_27 = arith.constant dense<0.000000e+00> : vector<8x128xf32>
    %86 = tpu.matmul %85, %21, %cst_27 {dimension_numbers = #tpu.dot_dimension_numbers<[1], [0], [0], [1], [0, 0, 1, 1], [], []>} : vector<8x32xbf16>, vector<32x128xbf16>, vector<8x128xf32> -> vector<8x128xf32>
    %87 = arith.addf %84, %86 : vector<8x128xf32>
    %88 = arith.mulf %20, %87 : vector<8x128xf32>
    %89 = math.tanh %88 : vector<8x128xf32>
    %cst_28 = arith.constant 5.000000e-01 : f32
    %90 = vector.broadcast %cst_28 : f32 to vector<8x128xf32>
    %91 = arith.mulf %90, %89 : vector<8x128xf32>
    %cst_29 = arith.constant 5.000000e-01 : f32
    %92 = vector.broadcast %cst_29 : f32 to vector<8x128xf32>
    %93 = arith.addf %91, %92 : vector<8x128xf32>
    %94 = arith.select %17, %89, %93 : vector<8x128xi1>, vector<8x128xf32>
    %95 = vector.extract_strided_slice %94 {offsets = [0, 0], sizes = [8, 32], strides = [1, 1]} : vector<8x128xf32> to vector<8x32xf32>
    %96 = vector.extract_strided_slice %94 {offsets = [0, 32], sizes = [8, 32], strides = [1, 1]} : vector<8x128xf32> to vector<8x32xf32>
    %97 = vector.extract_strided_slice %94 {offsets = [0, 64], sizes = [8, 32], strides = [1, 1]} : vector<8x128xf32> to vector<8x32xf32>
    %98 = vector.extract_strided_slice %94 {offsets = [0, 96], sizes = [8, 32], strides = [1, 1]} : vector<8x128xf32> to vector<8x32xf32>
    %99 = arith.mulf %96, %81 : vector<8x32xf32>
    %100 = arith.mulf %95, %97 : vector<8x32xf32>
    %101 = arith.addf %99, %100 : vector<8x32xf32>
    %102 = math.tanh %101 : vector<8x32xf32>
    %103 = arith.mulf %98, %102 : vector<8x32xf32>
    %104 = vector.extract_strided_slice %5 {offsets = [32, 0], sizes = [8, 128], strides = [1, 1]} : vector<64x128xf32> to vector<8x128xf32>
    %105 = arith.truncf %103 : vector<8x32xf32> to vector<8x32xbf16>
    %cst_30 = arith.constant dense<0.000000e+00> : vector<8x128xf32>
    %106 = tpu.matmul %105, %21, %cst_30 {dimension_numbers = #tpu.dot_dimension_numbers<[1], [0], [0], [1], [0, 0, 1, 1], [], []>} : vector<8x32xbf16>, vector<32x128xbf16>, vector<8x128xf32> -> vector<8x128xf32>
    %107 = arith.addf %104, %106 : vector<8x128xf32>
    %108 = arith.mulf %20, %107 : vector<8x128xf32>
    %109 = math.tanh %108 : vector<8x128xf32>
    %cst_31 = arith.constant 5.000000e-01 : f32
    %110 = vector.broadcast %cst_31 : f32 to vector<8x128xf32>
    %111 = arith.mulf %110, %109 : vector<8x128xf32>
    %cst_32 = arith.constant 5.000000e-01 : f32
    %112 = vector.broadcast %cst_32 : f32 to vector<8x128xf32>
    %113 = arith.addf %111, %112 : vector<8x128xf32>
    %114 = arith.select %17, %109, %113 : vector<8x128xi1>, vector<8x128xf32>
    %115 = vector.extract_strided_slice %114 {offsets = [0, 0], sizes = [8, 32], strides = [1, 1]} : vector<8x128xf32> to vector<8x32xf32>
    %116 = vector.extract_strided_slice %114 {offsets = [0, 32], sizes = [8, 32], strides = [1, 1]} : vector<8x128xf32> to vector<8x32xf32>
    %117 = vector.extract_strided_slice %114 {offsets = [0, 64], sizes = [8, 32], strides = [1, 1]} : vector<8x128xf32> to vector<8x32xf32>
    %118 = vector.extract_strided_slice %114 {offsets = [0, 96], sizes = [8, 32], strides = [1, 1]} : vector<8x128xf32> to vector<8x32xf32>
    %119 = arith.mulf %116, %101 : vector<8x32xf32>
    %120 = arith.mulf %115, %117 : vector<8x32xf32>
    %121 = arith.addf %119, %120 : vector<8x32xf32>
    %122 = math.tanh %121 : vector<8x32xf32>
    %123 = arith.mulf %118, %122 : vector<8x32xf32>
    %124 = vector.extract_strided_slice %5 {offsets = [40, 0], sizes = [8, 128], strides = [1, 1]} : vector<64x128xf32> to vector<8x128xf32>
    %125 = arith.truncf %123 : vector<8x32xf32> to vector<8x32xbf16>
    %cst_33 = arith.constant dense<0.000000e+00> : vector<8x128xf32>
    %126 = tpu.matmul %125, %21, %cst_33 {dimension_numbers = #tpu.dot_dimension_numbers<[1], [0], [0], [1], [0, 0, 1, 1], [], []>} : vector<8x32xbf16>, vector<32x128xbf16>, vector<8x128xf32> -> vector<8x128xf32>
    %127 = arith.addf %124, %126 : vector<8x128xf32>
    %128 = arith.mulf %20, %127 : vector<8x128xf32>
    %129 = math.tanh %128 : vector<8x128xf32>
    %cst_34 = arith.constant 5.000000e-01 : f32
    %130 = vector.broadcast %cst_34 : f32 to vector<8x128xf32>
    %131 = arith.mulf %130, %129 : vector<8x128xf32>
    %cst_35 = arith.constant 5.000000e-01 : f32
    %132 = vector.broadcast %cst_35 : f32 to vector<8x128xf32>
    %133 = arith.addf %131, %132 : vector<8x128xf32>
    %134 = arith.select %17, %129, %133 : vector<8x128xi1>, vector<8x128xf32>
    %135 = vector.extract_strided_slice %134 {offsets = [0, 0], sizes = [8, 32], strides = [1, 1]} : vector<8x128xf32> to vector<8x32xf32>
    %136 = vector.extract_strided_slice %134 {offsets = [0, 32], sizes = [8, 32], strides = [1, 1]} : vector<8x128xf32> to vector<8x32xf32>
    %137 = vector.extract_strided_slice %134 {offsets = [0, 64], sizes = [8, 32], strides = [1, 1]} : vector<8x128xf32> to vector<8x32xf32>
    %138 = vector.extract_strided_slice %134 {offsets = [0, 96], sizes = [8, 32], strides = [1, 1]} : vector<8x128xf32> to vector<8x32xf32>
    %139 = arith.mulf %136, %121 : vector<8x32xf32>
    %140 = arith.mulf %135, %137 : vector<8x32xf32>
    %141 = arith.addf %139, %140 : vector<8x32xf32>
    %142 = math.tanh %141 : vector<8x32xf32>
    %143 = arith.mulf %138, %142 : vector<8x32xf32>
    %144 = vector.extract_strided_slice %5 {offsets = [48, 0], sizes = [8, 128], strides = [1, 1]} : vector<64x128xf32> to vector<8x128xf32>
    %145 = arith.truncf %143 : vector<8x32xf32> to vector<8x32xbf16>
    %cst_36 = arith.constant dense<0.000000e+00> : vector<8x128xf32>
    %146 = tpu.matmul %145, %21, %cst_36 {dimension_numbers = #tpu.dot_dimension_numbers<[1], [0], [0], [1], [0, 0, 1, 1], [], []>} : vector<8x32xbf16>, vector<32x128xbf16>, vector<8x128xf32> -> vector<8x128xf32>
    %147 = arith.addf %144, %146 : vector<8x128xf32>
    %148 = arith.mulf %20, %147 : vector<8x128xf32>
    %149 = math.tanh %148 : vector<8x128xf32>
    %cst_37 = arith.constant 5.000000e-01 : f32
    %150 = vector.broadcast %cst_37 : f32 to vector<8x128xf32>
    %151 = arith.mulf %150, %149 : vector<8x128xf32>
    %cst_38 = arith.constant 5.000000e-01 : f32
    %152 = vector.broadcast %cst_38 : f32 to vector<8x128xf32>
    %153 = arith.addf %151, %152 : vector<8x128xf32>
    %154 = arith.select %17, %149, %153 : vector<8x128xi1>, vector<8x128xf32>
    %155 = vector.extract_strided_slice %154 {offsets = [0, 0], sizes = [8, 32], strides = [1, 1]} : vector<8x128xf32> to vector<8x32xf32>
    %156 = vector.extract_strided_slice %154 {offsets = [0, 32], sizes = [8, 32], strides = [1, 1]} : vector<8x128xf32> to vector<8x32xf32>
    %157 = vector.extract_strided_slice %154 {offsets = [0, 64], sizes = [8, 32], strides = [1, 1]} : vector<8x128xf32> to vector<8x32xf32>
    %158 = vector.extract_strided_slice %154 {offsets = [0, 96], sizes = [8, 32], strides = [1, 1]} : vector<8x128xf32> to vector<8x32xf32>
    %159 = arith.mulf %156, %141 : vector<8x32xf32>
    %160 = arith.mulf %155, %157 : vector<8x32xf32>
    %161 = arith.addf %159, %160 : vector<8x32xf32>
    %162 = math.tanh %161 : vector<8x32xf32>
    %163 = arith.mulf %158, %162 : vector<8x32xf32>
    %164 = vector.extract_strided_slice %5 {offsets = [56, 0], sizes = [8, 128], strides = [1, 1]} : vector<64x128xf32> to vector<8x128xf32>
    %165 = arith.truncf %163 : vector<8x32xf32> to vector<8x32xbf16>
    %cst_39 = arith.constant dense<0.000000e+00> : vector<8x128xf32>
    %166 = tpu.matmul %165, %21, %cst_39 {dimension_numbers = #tpu.dot_dimension_numbers<[1], [0], [0], [1], [0, 0, 1, 1], [], []>} : vector<8x32xbf16>, vector<32x128xbf16>, vector<8x128xf32> -> vector<8x128xf32>
    %167 = arith.addf %164, %166 : vector<8x128xf32>
    %168 = arith.mulf %20, %167 : vector<8x128xf32>
    %169 = math.tanh %168 : vector<8x128xf32>
    %cst_40 = arith.constant 5.000000e-01 : f32
    %170 = vector.broadcast %cst_40 : f32 to vector<8x128xf32>
    %171 = arith.mulf %170, %169 : vector<8x128xf32>
    %cst_41 = arith.constant 5.000000e-01 : f32
    %172 = vector.broadcast %cst_41 : f32 to vector<8x128xf32>
    %173 = arith.addf %171, %172 : vector<8x128xf32>
    %174 = arith.select %17, %169, %173 : vector<8x128xi1>, vector<8x128xf32>
    %175 = vector.extract_strided_slice %174 {offsets = [0, 0], sizes = [8, 32], strides = [1, 1]} : vector<8x128xf32> to vector<8x32xf32>
    %176 = vector.extract_strided_slice %174 {offsets = [0, 32], sizes = [8, 32], strides = [1, 1]} : vector<8x128xf32> to vector<8x32xf32>
    %177 = vector.extract_strided_slice %174 {offsets = [0, 64], sizes = [8, 32], strides = [1, 1]} : vector<8x128xf32> to vector<8x32xf32>
    %178 = vector.extract_strided_slice %174 {offsets = [0, 96], sizes = [8, 32], strides = [1, 1]} : vector<8x128xf32> to vector<8x32xf32>
    %179 = arith.mulf %176, %161 : vector<8x32xf32>
    %180 = arith.mulf %175, %177 : vector<8x32xf32>
    %181 = arith.addf %179, %180 : vector<8x32xf32>
    %182 = math.tanh %181 : vector<8x32xf32>
    %183 = arith.mulf %178, %182 : vector<8x32xf32>
    %184 = arith.truncf %183 : vector<8x32xf32> to vector<8x32xbf16>
    %c0_42 = arith.constant 0 : index
    %c0_43 = arith.constant 0 : index
    %185 = vector.load %arg6[%c0_42, %c0_43] : memref<32x128xbf16, #tpu.memory_space<vmem>>, vector<32x128xbf16>
    %cst_44 = arith.constant dense<0.000000e+00> : vector<8x128xf32>
    %186 = tpu.matmul %184, %185, %cst_44 {dimension_numbers = #tpu.dot_dimension_numbers<[1], [0], [0], [1], [0, 0, 1, 1], [], []>} : vector<8x32xbf16>, vector<32x128xbf16>, vector<8x128xf32> -> vector<8x128xf32>
    %187 = arith.addf %11, %186 : vector<8x128xf32>
    %cst_45 = arith.constant 0.00999999977 : f32
    %188 = vector.broadcast %cst_45 : f32 to vector<8x128xf32>
    %189 = arith.mulf %188, %187 : vector<8x128xf32>
    %190 = arith.maximumf %187, %189 : vector<8x128xf32>
    %191 = arith.truncf %190 : vector<8x128xf32> to vector<8x128xbf16>
    %c0_46 = arith.constant 0 : index
    %c0_47 = arith.constant 0 : index
    %192 = vector.load %arg8[%c0_46, %c0_47] : memref<128x128xbf16, #tpu.memory_space<vmem>>, vector<128x128xbf16>
    %cst_48 = arith.constant dense<0.000000e+00> : vector<8x128xf32>
    %193 = tpu.matmul %191, %192, %cst_48 {dimension_numbers = #tpu.dot_dimension_numbers<[1], [0], [0], [1], [0, 0, 1, 1], [], []>} : vector<8x128xbf16>, vector<128x128xbf16>, vector<8x128xf32> -> vector<8x128xf32>
    %c0_49 = arith.constant 0 : index
    %c0_50 = arith.constant 0 : index
    %194 = vector.load %arg9[%c0_49, %c0_50] : memref<1x128xf32, #tpu.memory_space<vmem>>, vector<1x128xf32>
    %195 = vector.broadcast %194 : vector<1x128xf32> to vector<8x128xf32>
    %196 = arith.addf %193, %195 : vector<8x128xf32>
    %cst_51 = arith.constant 0.00999999977 : f32
    %197 = vector.broadcast %cst_51 : f32 to vector<8x128xf32>
    %198 = arith.mulf %197, %196 : vector<8x128xf32>
    %199 = arith.maximumf %196, %198 : vector<8x128xf32>
    %200 = arith.truncf %199 : vector<8x128xf32> to vector<8x128xbf16>
    %c0_52 = arith.constant 0 : index
    %c0_53 = arith.constant 0 : index
    %201 = vector.load %arg10[%c0_52, %c0_53] : memref<128x128xbf16, #tpu.memory_space<vmem>>, vector<128x128xbf16>
    %cst_54 = arith.constant dense<0.000000e+00> : vector<8x128xf32>
    %202 = tpu.matmul %200, %201, %cst_54 {dimension_numbers = #tpu.dot_dimension_numbers<[1], [0], [0], [1], [0, 0, 1, 1], [], []>} : vector<8x128xbf16>, vector<128x128xbf16>, vector<8x128xf32> -> vector<8x128xf32>
    %c0_55 = arith.constant 0 : index
    %c0_56 = arith.constant 0 : index
    %203 = vector.load %arg11[%c0_55, %c0_56] : memref<1x128xf32, #tpu.memory_space<vmem>>, vector<1x128xf32>
    %204 = vector.broadcast %203 : vector<1x128xf32> to vector<8x128xf32>
    %205 = arith.addf %202, %204 : vector<8x128xf32>
    %206 = math.absf %205 : vector<8x128xf32>
    %cst_57 = arith.constant 1.000000e+00 : f32
    %207 = vector.broadcast %cst_57 : f32 to vector<8x128xf32>
    %208 = arith.addf %207, %206 : vector<8x128xf32>
    %209 = arith.divf %205, %208 : vector<8x128xf32>
    %c0_58 = arith.constant 0 : index
    %c0_59 = arith.constant 0 : index
    %210 = vector.load %arg12[%c0_58, %c0_59] : memref<8x128xf32, #tpu.memory_space<vmem>>, vector<8x128xf32>
    tpu.vector_store %arg12[%c0_58, %c0_59], %209 {strides = array<i32>} : memref<8x128xf32, #tpu.memory_space<vmem>>, vector<8x128xf32>,
    return
  }
}

</mosaic_0001>

<llo_original>
// kernel: actor_forward.1
$region0: #{actor_forward.1}
  #allocation0 [shape = 'u32[]', space=smem, size = 0x4, offset = 0x4, fixed_abs, tag = 'smem constant byte address 0x4 - core index']
  #allocation1 [shape = 'u32[144,128]{1,0:T(1,128)}', space=vmem, size = 0x12000, scoped, tag = 'internal scratch']
  %s0 = inlined_call_operand.vmem [shape: bf16[8,12], index: 0, kind: input, shape index: {}]
  %s1 = inlined_call_operand.vmem [shape: bf16[64,6], index: 1, kind: input, shape index: {}]
  %s2 = inlined_call_operand.hbm [shape: bf16[6,128], index: 2, kind: input, shape index: {}]
  %s3 = inlined_call_operand.hbm [shape: bf16[32,128], index: 3, kind: input, shape index: {}]
  %s4 = inlined_call_operand.vmem [shape: f32[1,128], index: 4, kind: input, shape index: {}]
  %s5 = inlined_call_operand.vmem [shape: bf16[12,128], index: 5, kind: input, shape index: {}]
  %s6 = inlined_call_operand.hbm [shape: bf16[32,128], index: 6, kind: input, shape index: {}]
  %s7 = inlined_call_operand.vmem [shape: f32[1,128], index: 7, kind: input, shape index: {}]
  %s8 = inlined_call_operand.vmem [shape: bf16[128,128], index: 8, kind: input, shape index: {}]
  %s9 = inlined_call_operand.hbm [shape: f32[1,128], index: 9, kind: input, shape index: {}]
  %s10 = inlined_call_operand.vmem [shape: bf16[128,128], index: 10, kind: input, shape index: {}]
  %s11 = inlined_call_operand.hbm [shape: f32[1,128], index: 11, kind: input, shape index: {}]
  %s12 = inlined_call_operand.vmem [shape: f32[8,128], index: 12, kind: output, shape index: {}]
  %s13 = sld [smem:[#allocation0]]
  $region78: #{actor_forward.1} parent=0
    _
  %s15 = ssub.s32 1, %s13
  %s16 = scalar_select 0, %s15, %s13
  $region1: #{actor_forward.1} parent=0
    #allocation2 [shape = 'u8[2048]{0}', space=vmem, size = 0x800, scoped, tag = 'input window, operand 2, single buffered']
    #allocation3 [shape = 's32[1]{0}', space=sflag, size = 0x4, scoped, tag = 'scoped memory for actor_forward.1']
    #allocation4 [shape = 'u8[8192]{0}', space=vmem, size = 0x2000, scoped, tag = 'input window, operand 3, single buffered']
    #allocation5 [shape = 's32[1]{0}', space=sflag, size = 0x4, scoped, tag = 'scoped memory for actor_forward.1']
    #allocation6 [shape = 'u8[8192]{0}', space=vmem, size = 0x2000, scoped, tag = 'input window, operand 6, single buffered']
    #allocation7 [shape = 'u8[512]{0}', space=vmem, size = 0x400, scoped, tag = 'input window, operand 9, single buffered']
    #allocation8 [shape = 's32[1]{0}', space=sflag, size = 0x4, scoped, tag = 'scoped memory for actor_forward.1']
    #allocation9 [shape = 'u8[512]{0}', space=vmem, size = 0x400, scoped, tag = 'input window, operand 11, single buffered']
    %17 = vsyncpa [#allocation3], 0
    %18 = vsyncpa [#allocation5], 0
    %19 = vsyncpa [#allocation8], 0
    // Predicated region
    $region2: #{actor_forward.1} parent=1 // pred_check
      _
    $region3: #{actor_forward.1} parent=1 // pred_check_branch
      %21 = sbr.rel (0) target = $region5
    $region4: #{actor_forward.1} parent=1 // pred_region
      _
    $region5: #{actor_forward.1} parent=1 // pred_fallthru
      _
    // Predicated region
    $region6: #{actor_forward.1} parent=1 // pred_check
      _
    $region7: #{actor_forward.1} parent=1 // pred_check_branch
      %23 = sbr.rel (0) target = $region9
    $region8: #{actor_forward.1} parent=1 // pred_region
      _
    $region9: #{actor_forward.1} parent=1 // pred_fallthru
      _
    // Predicated region
    $region10: #{actor_forward.1} parent=1 // pred_check
      _
    $region11: #{actor_forward.1} parent=1 // pred_check_branch
      %25 = sbr.rel (0) target = $region13
    $region12: #{actor_forward.1} parent=1 // pred_region
      %s27 = ssub.s32 64, 64
      %28 = vsyncadd [#allocation3], %s27
      %s30 = sshll.u32 [#allocation2], 4
      %s31 = int_to_ptr.vmem [resolvable:$true] %s30
      %33 = dma.hbm_to_vmem [thread:$0]  %s2, 64, %s31, [#allocation3]
    $region13: #{actor_forward.1} parent=1 // pred_fallthru
      _
    // Predicated region
    $region14: #{actor_forward.1} parent=1 // pred_check
      _
    $region15: #{actor_forward.1} parent=1 // pred_check_branch
      %35 = sbr.rel (0) target = $region17
    $region16: #{actor_forward.1} parent=1 // pred_region
      %s37 = ssub.s32 256, 256
      %38 = vsyncadd [#allocation5], %s37
      %s39 = sshll.u32 [#allocation4], 4
      %s40 = int_to_ptr.vmem [resolvable:$true] %s39
      %45 = dma.hbm_to_vmem [thread:$0]  %s3, 256, %s40, [#allocation5], 64, 64, 4
    $region17: #{actor_forward.1} parent=1 // pred_fallthru
      _
    // Predicated region
    $region18: #{actor_forward.1} parent=1 // pred_check
      _
    $region19: #{actor_forward.1} parent=1 // pred_check_branch
      %47 = sbr.rel (0) target = $region21
    $region20: #{actor_forward.1} parent=1 // pred_region
      _
    $region21: #{actor_forward.1} parent=1 // pred_fallthru
      _
    // Predicated region
    $region22: #{actor_forward.1} parent=1 // pred_check
      _
    $region23: #{actor_forward.1} parent=1 // pred_check_branch
      %49 = sbr.rel (0) target = $region25
    $region24: #{actor_forward.1} parent=1 // pred_region
      _
    $region25: #{actor_forward.1} parent=1 // pred_fallthru
      _
    // Predicated region
    $region26: #{actor_forward.1} parent=1 // pred_check
      _
    $region27: #{actor_forward.1} parent=1 // pred_check_branch
      %51 = sbr.rel (0) target = $region29
    $region28: #{actor_forward.1} parent=1 // pred_region
      %s53 = ssub.s32 256, 256
      %54 = vsyncadd [#allocation5], %s53
      %s55 = sshll.u32 [#allocation6], 4
      %s56 = int_to_ptr.vmem [resolvable:$true] %s55
      %61 = dma.hbm_to_vmem [thread:$0]  %s6, 256, %s56, [#allocation5], 64, 64, 4
    $region29: #{actor_forward.1} parent=1 // pred_fallthru
      _
    // Predicated region
    $region30: #{actor_forward.1} parent=1 // pred_check
      _
    $region31: #{actor_forward.1} parent=1 // pred_check_branch
      %63 = sbr.rel (0) target = $region33
    $region32: #{actor_forward.1} parent=1 // pred_region
      _
    $region33: #{actor_forward.1} parent=1 // pred_fallthru
      _
    // Predicated region
    $region34: #{actor_forward.1} parent=1 // pred_check
      _
    $region35: #{actor_forward.1} parent=1 // pred_check_branch
      %65 = sbr.rel (0) target = $region37
    $region36: #{actor_forward.1} parent=1 // pred_region
      _
    $region37: #{actor_forward.1} parent=1 // pred_fallthru
      _
    // Predicated region
    $region38: #{actor_forward.1} parent=1 // pred_check
      _
    $region39: #{actor_forward.1} parent=1 // pred_check_branch
      %67 = sbr.rel (0) target = $region41
    $region40: #{actor_forward.1} parent=1 // pred_region
      %s69 = ssub.s32 16, 16
      %70 = vsyncadd [#allocation8], %s69
      %s72 = sshll.u32 [#allocation7], 4
      %s73 = int_to_ptr.vmem [resolvable:$true] %s72
      %75 = dma.hbm_to_vmem [thread:$0]  %s9, 16, %s73, [#allocation8]
    $region41: #{actor_forward.1} parent=1 // pred_fallthru
      _
    // Predicated region
    $region42: #{actor_forward.1} parent=1 // pred_check
      _
    $region43: #{actor_forward.1} parent=1 // pred_check_branch
      %77 = sbr.rel (0) target = $region45
    $region44: #{actor_forward.1} parent=1 // pred_region
      _
    $region45: #{actor_forward.1} parent=1 // pred_fallthru
      _
    // Predicated region
    $region46: #{actor_forward.1} parent=1 // pred_check
      _
    $region47: #{actor_forward.1} parent=1 // pred_check_branch
      %79 = sbr.rel (0) target = $region49
    $region48: #{actor_forward.1} parent=1 // pred_region
      %s81 = ssub.s32 16, 16
      %82 = vsyncadd [#allocation8], %s81
      %s84 = sshll.u32 [#allocation9], 4
      %s85 = int_to_ptr.vmem [resolvable:$true] %s84
      %87 = dma.hbm_to_vmem [thread:$0]  %s11, 16, %s85, [#allocation8]
    $region49: #{actor_forward.1} parent=1 // pred_fallthru
      _
    // Predicated region
    $region50: #{actor_forward.1} parent=1 // pred_check
      _
    $region51: #{actor_forward.1} parent=1 // pred_check_branch
      %89 = sbr.rel (0) target = $region53
    $region52: #{actor_forward.1} parent=1 // pred_region
      %90 = dma.done [#allocation3], 64
    $region53: #{actor_forward.1} parent=1 // pred_fallthru
      _
    // Predicated region
    $region54: #{actor_forward.1} parent=1 // pred_check
      _
    $region55: #{actor_forward.1} parent=1 // pred_check_branch
      %92 = sbr.rel (0) target = $region57
    $region56: #{actor_forward.1} parent=1 // pred_region
      %93 = dma.done [#allocation5], 256
    $region57: #{actor_forward.1} parent=1 // pred_fallthru
      _
    // Predicated region
    $region58: #{actor_forward.1} parent=1 // pred_check
      _
    $region59: #{actor_forward.1} parent=1 // pred_check_branch
      %95 = sbr.rel (0) target = $region61
    $region60: #{actor_forward.1} parent=1 // pred_region
      %96 = dma.done [#allocation5], 256
    $region61: #{actor_forward.1} parent=1 // pred_fallthru
      _
    // Predicated region
    $region62: #{actor_forward.1} parent=1 // pred_check
      _
    $region63: #{actor_forward.1} parent=1 // pred_check_branch
      %98 = sbr.rel (0) target = $region65
    $region64: #{actor_forward.1} parent=1 // pred_region
      %99 = dma.done [#allocation8], 16
    $region65: #{actor_forward.1} parent=1 // pred_fallthru
      _
    // Predicated region
    $region66: #{actor_forward.1} parent=1 // pred_check
      _
    $region67: #{actor_forward.1} parent=1 // pred_check_branch
      %101 = sbr.rel (0) target = $region69
    $region68: #{actor_forward.1} parent=1 // pred_region
      %102 = dma.done [#allocation8], 16
    $region69: #{actor_forward.1} parent=1 // pred_fallthru
      _
    %v104 = vld [vmem:[%s1] sm:$0xf]
    %v105 = vld [vmem:[%s1 + $0x4] sm:$0xf]
    %v106 = vld [vmem:[%s1 + $0x8] sm:$0xf]
    %v107 = vld [vmem:[%s1 + $0xc] sm:$0xf]
    %v108 = vld [vmem:[%s1 + $0x10] sm:$0xf]
    %v109 = vld [vmem:[%s1 + $0x14] sm:$0xf]
    %v110 = vld [vmem:[%s1 + $0x18] sm:$0xf]
    %v111 = vld [vmem:[%s1 + $0x1c] sm:$0xf]
    %v112 = vld [vmem:[#allocation2] sm:$0x7]
    %v113 = vld [vmem:[%s4] sm:$0x1]
    %v115 = vlaneseq
    %v116 = vshrl.u32 %v115, 7
    %v117 = vsub.s32 0, %v116
    %v118 = vrot.slane %v113, %v117
    %v128 = vunpack.c.l.b16 %v104
    %v129 = vunpack.c.l.b16 %v105
    %v130 = vunpack.c.l.b16 %v106
    %v131 = vunpack.c.l.b16 %v107
    %v132 = vunpack.c.l.b16 %v108
    %v133 = vunpack.c.l.b16 %v109
    %v134 = vunpack.c.l.b16 %v110
    %v135 = vunpack.c.l.b16 %v111
    %v136 = vpack.c.b16 %v129, %v128
    %v137 = vpack.c.b16 %v131, %v130
    %v138 = vpack.c.b16 %v133, %v132
    %v139 = vpack.c.b16 %v135, %v134
    %vm140 = vcmask 48128
    %v142 = vsel %vm140, %v136, 0
    %v145 = vsel %vm140, %v137, 0
    %v148 = vsel %vm140, %v138, 0
    %v151 = vsel %vm140, %v139, 0
    %vm153 = vcmask 1042432
    %v155 = vsel %vm153, %v112, 0
    %157 = vmatprep.subr.bf16.mxu0 0
    %158 = vmatpush1.bf16.msra.mxu0 %v155
    %159 = vmatprep.subr.bf16.mxu0 0
    %160 = vmatpush1.bf16.msra.mxu0 0
    %161 = vmatprep.subr.bf16.mxu0 0
    %162 = vmatpush1.bf16.msra.mxu0 0
    %163 = vmatprep.subr.bf16.mxu0 0
    %164 = vmatpush1.bf16.msra.mxu0 0
    %165 = vmatprep.subr.bf16.mxu0 0
    %166 = vmatpush1.bf16.msra.mxu0 0
    %167 = vmatprep.subr.bf16.mxu0 0
    %168 = vmatpush1.bf16.msra.mxu0 0
    %169 = vmatprep.subr.bf16.mxu0 0
    %170 = vmatpush1.bf16.msra.mxu0 0
    %171 = vmatprep.subr.bf16.mxu0 0
    %172 = vmatpush1.bf16.msra.mxu0 0
    %173 = vmatprep.subr.bf16.mxu0 0
    %174 = vmatpush1.bf16.msra.mxu0 0
    %175 = vmatprep.subr.bf16.mxu0 0
    %176 = vmatpush1.bf16.msra.mxu0 0
    %177 = vmatprep.subr.bf16.mxu0 0
    %178 = vmatpush1.bf16.msra.mxu0 0
    %179 = vmatprep.subr.bf16.mxu0 0
    %180 = vmatpush1.bf16.msra.mxu0 0
    %181 = vmatprep.subr.bf16.mxu0 0
    %182 = vmatpush1.bf16.msra.mxu0 0
    %183 = vmatprep.subr.bf16.mxu0 0
    %184 = vmatpush1.bf16.msra.mxu0 0
    %185 = vmatprep.subr.bf16.mxu0 0
    %186 = vmatpush1.bf16.msra.mxu0 0
    %187 = vmatprep.subr.bf16.mxu0 0
    %188 = vmatpush1.bf16.msra.mxu0 0
    %189 = vmatprep.mubr.bf16.mxu0 0
    %190 = vmatmul.mubr.bf16.gmra.mrb[0].mxu0 %v142
    %v191 = vpop.f32.mrb[0].mxu0
    %v192 = vadd.f32 %v118, %v191
    %v193 = vpop.f32.mrb[0].mxu0
    %v194 = vpop.f32.mrb[0].mxu0
    %v195 = vadd.f32 %v118, %v194
    %v196 = vpop.f32.mrb[0].mxu0
    %197 = vmatprep.mubr.bf16.mxu0 0
    %198 = vmatmul.mubr.bf16.gmra.mrb[0].mxu0 %v145
    %v199 = vpop.f32.mrb[0].mxu0
    %v200 = vadd.f32 %v118, %v199
    %v201 = vpop.f32.mrb[0].mxu0
    %v202 = vpop.f32.mrb[0].mxu0
    %v203 = vadd.f32 %v118, %v202
    %v204 = vpop.f32.mrb[0].mxu0
    %205 = vmatprep.mubr.bf16.mxu0 0
    %206 = vmatmul.mubr.bf16.gmra.mrb[0].mxu0 %v148
    %v207 = vpop.f32.mrb[0].mxu0
    %v208 = vadd.f32 %v118, %v207
    %v209 = vpop.f32.mrb[0].mxu0
    %v210 = vpop.f32.mrb[0].mxu0
    %v211 = vadd.f32 %v118, %v210
    %v212 = vpop.f32.mrb[0].mxu0
    %213 = vmatprep.mubr.bf16.mxu0 0
    %214 = vmatmul.mubr.bf16.gmra.mrb[0].mxu0 %v151
    %v215 = vpop.f32.mrb[0].mxu0
    %v216 = vadd.f32 %v118, %v215
    %v217 = vpop.f32.mrb[0].mxu0
    %v218 = vpop.f32.mrb[0].mxu0
    %v219 = vadd.f32 %v118, %v218
    %v220 = vpop.f32.mrb[0].mxu0
    %221 = vdwg.mxu0
    %v222 = vld [vmem:[%s0] sm:$0xf]
    %v223 = vld [vmem:[%s5] sm:$0xf]
    %v224 = vld [vmem:[%s5 + $0x4] sm:$0x3]
    %v225 = vld [vmem:[%s7] sm:$0x1]
    %v227 = vlaneseq
    %v228 = vshrl.u32 %v227, 7
    %v229 = vsub.s32 0, %v228
    %v230 = vrot.slane %v225, %v229
    %v234 = vunpack.c.l.b16 %v223
    %v235 = vunpack.c.l.b16 %v224
    %v236 = vpack.c.b16 %v235, %v234
    %vm237 = vcmask 97280
    %v239 = vsel %vm237, %v222, 0
    %vm241 = vcmask 1045504
    %v243 = vsel %vm241, %v236, 0
    %245 = vmatprep.subr.bf16.mxu0 0
    %246 = vmatpush1.bf16.msra.mxu0 %v243
    %247 = vmatprep.subr.bf16.mxu0 0
    %248 = vmatpush1.bf16.msra.mxu0 0
    %249 = vmatprep.subr.bf16.mxu0 0
    %250 = vmatpush1.bf16.msra.mxu0 0
    %251 = vmatprep.subr.bf16.mxu0 0
    %252 = vmatpush1.bf16.msra.mxu0 0
    %253 = vmatprep.subr.bf16.mxu0 0
    %254 = vmatpush1.bf16.msra.mxu0 0
    %255 = vmatprep.subr.bf16.mxu0 0
    %256 = vmatpush1.bf16.msra.mxu0 0
    %257 = vmatprep.subr.bf16.mxu0 0
    %258 = vmatpush1.bf16.msra.mxu0 0
    %259 = vmatprep.subr.bf16.mxu0 0
    %260 = vmatpush1.bf16.msra.mxu0 0
    %261 = vmatprep.subr.bf16.mxu0 0
    %262 = vmatpush1.bf16.msra.mxu0 0
    %263 = vmatprep.subr.bf16.mxu0 0
    %264 = vmatpush1.bf16.msra.mxu0 0
    %265 = vmatprep.subr.bf16.mxu0 0
    %266 = vmatpush1.bf16.msra.mxu0 0
    %267 = vmatprep.subr.bf16.mxu0 0
    %268 = vmatpush1.bf16.msra.mxu0 0
    %269 = vmatprep.subr.bf16.mxu0 0
    %270 = vmatpush1.bf16.msra.mxu0 0
    %271 = vmatprep.subr.bf16.mxu0 0
    %272 = vmatpush1.bf16.msra.mxu0 0
    %273 = vmatprep.subr.bf16.mxu0 0
    %274 = vmatpush1.bf16.msra.mxu0 0
    %275 = vmatprep.subr.bf16.mxu0 0
    %276 = vmatpush1.bf16.msra.mxu0 0
    %277 = vmatprep.mubr.bf16.mxu0 0
    %278 = vmatmul.mubr.bf16.gmra.mrb[0].mxu0 %v239
    %v279 = vpop.f32.mrb[0].mxu0
    %v280 = vadd.f32 %v230, %v279
    %v281 = vpop.f32.mrb[0].mxu0
    %v282 = vpop.f32.mrb[0].mxu0
    %v283 = vpop.f32.mrb[0].mxu0
    %284 = vdwg.mxu0
    %v285 = vlaneseq
    %v286 = vand.u32 %v285, 127
    %vm287 = vcmp.ge.s32.totalorder %v286, 64
    %vm288 = vcmp.lt.s32.totalorder %v286, 96
    %vm289 = vmand %vm287, %vm288
    %v290 = vsel %vm289, 1.0, 0.5
    %v291 = vld [vmem:[#allocation4] sm:$0xf]
    %v292 = vld [vmem:[#allocation4 + $0x4] sm:$0xf]
    %v293 = vld [vmem:[#allocation4 + $0x8] sm:$0xf]
    %v294 = vld [vmem:[#allocation4 + $0xc] sm:$0xf]
    %v299 = vunpack.c.l.b16 %v291
    %v300 = vunpack.c.l.b16 %v292
    %v301 = vunpack.c.l.b16 %v293
    %v302 = vunpack.c.l.b16 %v294
    %v303 = vpack.c.b16 %v300, %v299
    %v304 = vpack.c.b16 %v302, %v301
    %vm307 = vcmask 261120
    %v309 = vsel %vm307, 0, 0
    %311 = vmatprep.subr.bf16.mxu0 0
    %312 = vmatpush1.bf16.msra.mxu0 %v303
    %313 = vmatprep.subr.bf16.mxu0 0
    %314 = vmatpush1.bf16.msra.mxu0 %v304
    %315 = vmatprep.subr.bf16.mxu0 0
    %316 = vmatpush1.bf16.msra.mxu0 0
    %317 = vmatprep.subr.bf16.mxu0 0
    %318 = vmatpush1.bf16.msra.mxu0 0
    %319 = vmatprep.subr.bf16.mxu0 0
    %320 = vmatpush1.bf16.msra.mxu0 0
    %321 = vmatprep.subr.bf16.mxu0 0
    %322 = vmatpush1.bf16.msra.mxu0 0
    %323 = vmatprep.subr.bf16.mxu0 0
    %324 = vmatpush1.bf16.msra.mxu0 0
    %325 = vmatprep.subr.bf16.mxu0 0
    %326 = vmatpush1.bf16.msra.mxu0 0
    %327 = vmatprep.subr.bf16.mxu0 0
    %328 = vmatpush1.bf16.msra.mxu0 0
    %329 = vmatprep.subr.bf16.mxu0 0
    %330 = vmatpush1.bf16.msra.mxu0 0
    %331 = vmatprep.subr.bf16.mxu0 0
    %332 = vmatpush1.bf16.msra.mxu0 0
    %333 = vmatprep.subr.bf16.mxu0 0
    %334 = vmatpush1.bf16.msra.mxu0 0
    %335 = vmatprep.subr.bf16.mxu0 0
    %336 = vmatpush1.bf16.msra.mxu0 0
    %337 = vmatprep.subr.bf16.mxu0 0
    %338 = vmatpush1.bf16.msra.mxu0 0
    %339 = vmatprep.subr.bf16.mxu0 0
    %340 = vmatpush1.bf16.msra.mxu0 0
    %341 = vmatprep.subr.bf16.mxu0 0
    %342 = vmatpush1.bf16.msra.mxu0 0
    %343 = vmatprep.mubr.bf16.mxu0 0
    %344 = vmatmul.mubr.bf16.gmra.mrb[0].mxu0 %v309
    %v345 = vpop.f32.mrb[0].mxu0
    %v346 = vadd.f32 0.0, %v345
    %v347 = vpop.f32.mrb[0].mxu0
    %v348 = vpop.f32.mrb[0].mxu0
    %v349 = vpop.f32.mrb[0].mxu0
    %350 = vdwg.mxu0
    %v351 = vadd.f32 %v192, %v346
    %v352 = vmul.f32 %v290, %v351
    %v353 = vtanh.pop %v352
    %v354 = vmul.f32 %v353, 0.5
    %v355 = vadd.f32 %v354, 0.5
    %v356 = vsel %vm289, %v353, %v355
    %v357 = vmul.f32 %v356, 0.0
    %359 = vrot.lane.b32.xlu0 %v356, 64
    %v360 = vpop.permute.xlu0 %359
    %v362 = vmul.f32 %v356, %v360
    %364 = vrot.lane.b32.xlu0 %v362, 32
    %v365 = vpop.permute.xlu0 %364
    %v367 = vadd.f32 %v357, %v365
    %v368 = vtanh.pop %v367
    %370 = vrot.lane.b32.xlu0 %v368, 64
    %v371 = vpop.permute.xlu0 %370
    %v373 = vmul.f32 %v356, %v371
    %v374 = vpack.c.bf16 %v373, %v373
    %376 = vrot.lane.b32.xlu0 %v374, 32
    %v377 = vpop.permute.xlu0 %376
    %v379 = vsel %vm307, %v377, 0
    %381 = vmatprep.subr.bf16.mxu0 0
    %382 = vmatpush1.bf16.msra.mxu0 %v303
    %383 = vmatprep.subr.bf16.mxu0 0
    %384 = vmatpush1.bf16.msra.mxu0 %v304
    %385 = vmatprep.subr.bf16.mxu0 0
    %386 = vmatpush1.bf16.msra.mxu0 0
    %387 = vmatprep.subr.bf16.mxu0 0
    %388 = vmatpush1.bf16.msra.mxu0 0
    %389 = vmatprep.subr.bf16.mxu0 0
    %390 = vmatpush1.bf16.msra.mxu0 0
    %391 = vmatprep.subr.bf16.mxu0 0
    %392 = vmatpush1.bf16.msra.mxu0 0
    %393 = vmatprep.subr.bf16.mxu0 0
    %394 = vmatpush1.bf16.msra.mxu0 0
    %395 = vmatprep.subr.bf16.mxu0 0
    %396 = vmatpush1.bf16.msra.mxu0 0
    %397 = vmatprep.subr.bf16.mxu0 0
    %398 = vmatpush1.bf16.msra.mxu0 0
    %399 = vmatprep.subr.bf16.mxu0 0
    %400 = vmatpush1.bf16.msra.mxu0 0
    %401 = vmatprep.subr.bf16.mxu0 0
    %402 = vmatpush1.bf16.msra.mxu0 0
    %403 = vmatprep.subr.bf16.mxu0 0
    %404 = vmatpush1.bf16.msra.mxu0 0
    %405 = vmatprep.subr.bf16.mxu0 0
    %406 = vmatpush1.bf16.msra.mxu0 0
    %407 = vmatprep.subr.bf16.mxu0 0
    %408 = vmatpush1.bf16.msra.mxu0 0
    %409 = vmatprep.subr.bf16.mxu0 0
    %410 = vmatpush1.bf16.msra.mxu0 0
    %411 = vmatprep.subr.bf16.mxu0 0
    %412 = vmatpush1.bf16.msra.mxu0 0
    %413 = vmatprep.mubr.bf16.mxu0 0
    %414 = vmatmul.mubr.bf16.gmra.mrb[0].mxu0 %v379
    %v415 = vpop.f32.mrb[0].mxu0
    %v416 = vadd.f32 0.0, %v415
    %v417 = vpop.f32.mrb[0].mxu0
    %v418 = vpop.f32.mrb[0].mxu0
    %v419 = vpop.f32.mrb[0].mxu0
    %420 = vdwg.mxu0
    %v421 = vadd.f32 %v195, %v416
    %v422 = vmul.f32 %v290, %v421
    %v423 = vtanh.pop %v422
    %v424 = vmul.f32 %v423, 0.5
    %v425 = vadd.f32 %v424, 0.5
    %v426 = vsel %vm289, %v423, %v425
    %v427 = vmul.f32 %v426, %v367
    %429 = vrot.lane.b32.xlu0 %v426, 64
    %v430 = vpop.permute.xlu0 %429
    %v432 = vmul.f32 %v426, %v430
    %434 = vrot.lane.b32.xlu0 %v432, 32
    %v435 = vpop.permute.xlu0 %434
    %v437 = vadd.f32 %v427, %v435
    %v438 = vtanh.pop %v437
    %440 = vrot.lane.b32.xlu0 %v438, 64
    %v441 = vpop.permute.xlu0 %440
    %v443 = vmul.f32 %v426, %v441
    %v444 = vpack.c.bf16 %v443, %v443
    %446 = vrot.lane.b32.xlu0 %v444, 32
    %v447 = vpop.permute.xlu0 %446
    %v449 = vsel %vm307, %v447, 0
    %451 = vmatprep.subr.bf16.mxu0 0
    %452 = vmatpush1.bf16.msra.mxu0 %v303
    %453 = vmatprep.subr.bf16.mxu0 0
    %454 = vmatpush1.bf16.msra.mxu0 %v304
    %455 = vmatprep.subr.bf16.mxu0 0
    %456 = vmatpush1.bf16.msra.mxu0 0
    %457 = vmatprep.subr.bf16.mxu0 0
    %458 = vmatpush1.bf16.msra.mxu0 0
    %459 = vmatprep.subr.bf16.mxu0 0
    %460 = vmatpush1.bf16.msra.mxu0 0
    %461 = vmatprep.subr.bf16.mxu0 0
    %462 = vmatpush1.bf16.msra.mxu0 0
    %463 = vmatprep.subr.bf16.mxu0 0
    %464 = vmatpush1.bf16.msra.mxu0 0
    %465 = vmatprep.subr.bf16.mxu0 0
    %466 = vmatpush1.bf16.msra.mxu0 0
    %467 = vmatprep.subr.bf16.mxu0 0
    %468 = vmatpush1.bf16.msra.mxu0 0
    %469 = vmatprep.subr.bf16.mxu0 0
    %470 = vmatpush1.bf16.msra.mxu0 0
    %471 = vmatprep.subr.bf16.mxu0 0
    %472 = vmatpush1.bf16.msra.mxu0 0
    %473 = vmatprep.subr.bf16.mxu0 0
    %474 = vmatpush1.bf16.msra.mxu0 0
    %475 = vmatprep.subr.bf16.mxu0 0
    %476 = vmatpush1.bf16.msra.mxu0 0
    %477 = vmatprep.subr.bf16.mxu0 0
    %478 = vmatpush1.bf16.msra.mxu0 0
    %479 = vmatprep.subr.bf16.mxu0 0
    %480 = vmatpush1.bf16.msra.mxu0 0
    %481 = vmatprep.subr.bf16.mxu0 0
    %482 = vmatpush1.bf16.msra.mxu0 0
    %483 = vmatprep.mubr.bf16.mxu0 0
    %484 = vmatmul.mubr.bf16.gmra.mrb[0].mxu0 %v449
    %v485 = vpop.f32.mrb[0].mxu0
    %v486 = vadd.f32 0.0, %v485
    %v487 = vpop.f32.mrb[0].mxu0
    %v488 = vpop.f32.mrb[0].mxu0
    %v489 = vpop.f32.mrb[0].mxu0
    %490 = vdwg.mxu0
    %v491 = vadd.f32 %v200, %v486
    %v492 = vmul.f32 %v290, %v491
    %v493 = vtanh.pop %v492
    %v494 = vmul.f32 %v493, 0.5
    %v495 = vadd.f32 %v494, 0.5
    %v496 = vsel %vm289, %v493, %v495
    %v497 = vmul.f32 %v496, %v437
    %499 = vrot.lane.b32.xlu0 %v496, 64
    %v500 = vpop.permute.xlu0 %499
    %v502 = vmul.f32 %v496, %v500
    %504 = vrot.lane.b32.xlu0 %v502, 32
    %v505 = vpop.permute.xlu0 %504
    %v507 = vadd.f32 %v497, %v505
    %v508 = vtanh.pop %v507
    %510 = vrot.lane.b32.xlu0 %v508, 64
    %v511 = vpop.permute.xlu0 %510
    %v513 = vmul.f32 %v496, %v511
    %v514 = vpack.c.bf16 %v513, %v513
    %516 = vrot.lane.b32.xlu0 %v514, 32
    %v517 = vpop.permute.xlu0 %516
    %v519 = vsel %vm307, %v517, 0
    %521 = vmatprep.subr.bf16.mxu0 0
    %522 = vmatpush1.bf16.msra.mxu0 %v303
    %523 = vmatprep.subr.bf16.mxu0 0
    %524 = vmatpush1.bf16.msra.mxu0 %v304
    %525 = vmatprep.subr.bf16.mxu0 0
    %526 = vmatpush1.bf16.msra.mxu0 0
    %527 = vmatprep.subr.bf16.mxu0 0
    %528 = vmatpush1.bf16.msra.mxu0 0
    %529 = vmatprep.subr.bf16.mxu0 0
    %530 = vmatpush1.bf16.msra.mxu0 0
    %531 = vmatprep.subr.bf16.mxu0 0
    %532 = vmatpush1.bf16.msra.mxu0 0
    %533 = vmatprep.subr.bf16.mxu0 0
    %534 = vmatpush1.bf16.msra.mxu0 0
    %535 = vmatprep.subr.bf16.mxu0 0
    %536 = vmatpush1.bf16.msra.mxu0 0
    %537 = vmatprep.subr.bf16.mxu0 0
    %538 = vmatpush1.bf16.msra.mxu0 0
    %539 = vmatprep.subr.bf16.mxu0 0
    %540 = vmatpush1.bf16.msra.mxu0 0
    %541 = vmatprep.subr.bf16.mxu0 0
    %542 = vmatpush1.bf16.msra.mxu0 0
    %543 = vmatprep.subr.bf16.mxu0 0
    %544 = vmatpush1.bf16.msra.mxu0 0
    %545 = vmatprep.subr.bf16.mxu0 0
    %546 = vmatpush1.bf16.msra.mxu0 0
    %547 = vmatprep.subr.bf16.mxu0 0
    %548 = vmatpush1.bf16.msra.mxu0 0
    %549 = vmatprep.subr.bf16.mxu0 0
    %550 = vmatpush1.bf16.msra.mxu0 0
    %551 = vmatprep.subr.bf16.mxu0 0
    %552 = vmatpush1.bf16.msra.mxu0 0
    %553 = vmatprep.mubr.bf16.mxu0 0
    %554 = vmatmul.mubr.bf16.gmra.mrb[0].mxu0 %v519
    %v555 = vpop.f32.mrb[0].mxu0
    %v556 = vadd.f32 0.0, %v555
    %v557 = vpop.f32.mrb[0].mxu0
    %v558 = vpop.f32.mrb[0].mxu0
    %v559 = vpop.f32.mrb[0].mxu0
    %560 = vdwg.mxu0
    %v561 = vadd.f32 %v203, %v556
    %v562 = vmul.f32 %v290, %v561
    %v563 = vtanh.pop %v562
    %v564 = vmul.f32 %v563, 0.5
    %v565 = vadd.f32 %v564, 0.5
    %v566 = vsel %vm289, %v563, %v565
    %v567 = vmul.f32 %v566, %v507
    %569 = vrot.lane.b32.xlu0 %v566, 64
    %v570 = vpop.permute.xlu0 %569
    %v572 = vmul.f32 %v566, %v570
    %574 = vrot.lane.b32.xlu0 %v572, 32
    %v575 = vpop.permute.xlu0 %574
    %v577 = vadd.f32 %v567, %v575
    %v578 = vtanh.pop %v577
    %580 = vrot.lane.b32.xlu0 %v578, 64
    %v581 = vpop.permute.xlu0 %580
    %v583 = vmul.f32 %v566, %v581
    %v584 = vpack.c.bf16 %v583, %v583
    %586 = vrot.lane.b32.xlu0 %v584, 32
    %v587 = vpop.permute.xlu0 %586
    %v589 = vsel %vm307, %v587, 0
    %591 = vmatprep.subr.bf16.mxu0 0
    %592 = vmatpush1.bf16.msra.mxu0 %v303
    %593 = vmatprep.subr.bf16.mxu0 0
    %594 = vmatpush1.bf16.msra.mxu0 %v304
    %595 = vmatprep.subr.bf16.mxu0 0
    %596 = vmatpush1.bf16.msra.mxu0 0
    %597 = vmatprep.subr.bf16.mxu0 0
    %598 = vmatpush1.bf16.msra.mxu0 0
    %599 = vmatprep.subr.bf16.mxu0 0
    %600 = vmatpush1.bf16.msra.mxu0 0
    %601 = vmatprep.subr.bf16.mxu0 0
    %602 = vmatpush1.bf16.msra.mxu0 0
    %603 = vmatprep.subr.bf16.mxu0 0
    %604 = vmatpush1.bf16.msra.mxu0 0
    %605 = vmatprep.subr.bf16.mxu0 0
    %606 = vmatpush1.bf16.msra.mxu0 0
    %607 = vmatprep.subr.bf16.mxu0 0
    %608 = vmatpush1.bf16.msra.mxu0 0
    %609 = vmatprep.subr.bf16.mxu0 0
    %610 = vmatpush1.bf16.msra.mxu0 0
    %611 = vmatprep.subr.bf16.mxu0 0
    %612 = vmatpush1.bf16.msra.mxu0 0
    %613 = vmatprep.subr.bf16.mxu0 0
    %614 = vmatpush1.bf16.msra.mxu0 0
    %615 = vmatprep.subr.bf16.mxu0 0
    %616 = vmatpush1.bf16.msra.mxu0 0
    %617 = vmatprep.subr.bf16.mxu0 0
    %618 = vmatpush1.bf16.msra.mxu0 0
    %619 = vmatprep.subr.bf16.mxu0 0
    %620 = vmatpush1.bf16.msra.mxu0 0
    %621 = vmatprep.subr.bf16.mxu0 0
    %622 = vmatpush1.bf16.msra.mxu0 0
    %623 = vmatprep.mubr.bf16.mxu0 0
    %624 = vmatmul.mubr.bf16.gmra.mrb[0].mxu0 %v589
    %v625 = vpop.f32.mrb[0].mxu0
    %v626 = vadd.f32 0.0, %v625
    %v627 = vpop.f32.mrb[0].mxu0
    %v628 = vpop.f32.mrb[0].mxu0
    %v629 = vpop.f32.mrb[0].mxu0
    %630 = vdwg.mxu0
    %v631 = vadd.f32 %v208, %v626
    %v632 = vmul.f32 %v290, %v631
    %v633 = vtanh.pop %v632
    %v634 = vmul.f32 %v633, 0.5
    %v635 = vadd.f32 %v634, 0.5
    %v636 = vsel %vm289, %v633, %v635
    %v637 = vmul.f32 %v636, %v577
    %639 = vrot.lane.b32.xlu0 %v636, 64
    %v640 = vpop.permute.xlu0 %639
    %v642 = vmul.f32 %v636, %v640
    %644 = vrot.lane.b32.xlu0 %v642, 32
    %v645 = vpop.permute.xlu0 %644
    %v647 = vadd.f32 %v637, %v645
    %v648 = vtanh.pop %v647
    %650 = vrot.lane.b32.xlu0 %v648, 64
    %v651 = vpop.permute.xlu0 %650
    %v653 = vmul.f32 %v636, %v651
    %v654 = vpack.c.bf16 %v653, %v653
    %656 = vrot.lane.b32.xlu0 %v654, 32
    %v657 = vpop.permute.xlu0 %656
    %v659 = vsel %vm307, %v657, 0
    %661 = vmatprep.subr.bf16.mxu0 0
    %662 = vmatpush1.bf16.msra.mxu0 %v303
    %663 = vmatprep.subr.bf16.mxu0 0
    %664 = vmatpush1.bf16.msra.mxu0 %v304
    %665 = vmatprep.subr.bf16.mxu0 0
    %666 = vmatpush1.bf16.msra.mxu0 0
    %667 = vmatprep.subr.bf16.mxu0 0
    %668 = vmatpush1.bf16.msra.mxu0 0
    %669 = vmatprep.subr.bf16.mxu0 0
    %670 = vmatpush1.bf16.msra.mxu0 0
    %671 = vmatprep.subr.bf16.mxu0 0
    %672 = vmatpush1.bf16.msra.mxu0 0
    %673 = vmatprep.subr.bf16.mxu0 0
    %674 = vmatpush1.bf16.msra.mxu0 0
    %675 = vmatprep.subr.bf16.mxu0 0
    %676 = vmatpush1.bf16.msra.mxu0 0
    %677 = vmatprep.subr.bf16.mxu0 0
    %678 = vmatpush1.bf16.msra.mxu0 0
    %679 = vmatprep.subr.bf16.mxu0 0
    %680 = vmatpush1.bf16.msra.mxu0 0
    %681 = vmatprep.subr.bf16.mxu0 0
    %682 = vmatpush1.bf16.msra.mxu0 0
    %683 = vmatprep.subr.bf16.mxu0 0
    %684 = vmatpush1.bf16.msra.mxu0 0
    %685 = vmatprep.subr.bf16.mxu0 0
    %686 = vmatpush1.bf16.msra.mxu0 0
    %687 = vmatprep.subr.bf16.mxu0 0
    %688 = vmatpush1.bf16.msra.mxu0 0
    %689 = vmatprep.subr.bf16.mxu0 0
    %690 = vmatpush1.bf16.msra.mxu0 0
    %691 = vmatprep.subr.bf16.mxu0 0
    %692 = vmatpush1.bf16.msra.mxu0 0
    %693 = vmatprep.mubr.bf16.mxu0 0
    %694 = vmatmul.mubr.bf16.gmra.mrb[0].mxu0 %v659
    %v695 = vpop.f32.mrb[0].mxu0
    %v696 = vadd.f32 0.0, %v695
    %v697 = vpop.f32.mrb[0].mxu0
    %v698 = vpop.f32.mrb[0].mxu0
    %v699 = vpop.f32.mrb[0].mxu0
    %700 = vdwg.mxu0
    %v701 = vadd.f32 %v211, %v696
    %v702 = vmul.f32 %v290, %v701
    %v703 = vtanh.pop %v702
    %v704 = vmul.f32 %v703, 0.5
    %v705 = vadd.f32 %v704, 0.5
    %v706 = vsel %vm289, %v703, %v705
    %v707 = vmul.f32 %v706, %v647
    %709 = vrot.lane.b32.xlu0 %v706, 64
    %v710 = vpop.permute.xlu0 %709
    %v712 = vmul.f32 %v706, %v710
    %714 = vrot.lane.b32.xlu0 %v712, 32
    %v715 = vpop.permute.xlu0 %714
    %v717 = vadd.f32 %v707, %v715
    %v718 = vtanh.pop %v717
    %720 = vrot.lane.b32.xlu0 %v718, 64
    %v721 = vpop.permute.xlu0 %720
    %v723 = vmul.f32 %v706, %v721
    %v724 = vpack.c.bf16 %v723, %v723
    %726 = vrot.lane.b32.xlu0 %v724, 32
    %v727 = vpop.permute.xlu0 %726
    %v729 = vsel %vm307, %v727, 0
    %731 = vmatprep.subr.bf16.mxu0 0
    %732 = vmatpush1.bf16.msra.mxu0 %v303
    %733 = vmatprep.subr.bf16.mxu0 0
    %734 = vmatpush1.bf16.msra.mxu0 %v304
    %735 = vmatprep.subr.bf16.mxu0 0
    %736 = vmatpush1.bf16.msra.mxu0 0
    %737 = vmatprep.subr.bf16.mxu0 0
    %738 = vmatpush1.bf16.msra.mxu0 0
    %739 = vmatprep.subr.bf16.mxu0 0
    %740 = vmatpush1.bf16.msra.mxu0 0
    %741 = vmatprep.subr.bf16.mxu0 0
    %742 = vmatpush1.bf16.msra.mxu0 0
    %743 = vmatprep.subr.bf16.mxu0 0
    %744 = vmatpush1.bf16.msra.mxu0 0
    %745 = vmatprep.subr.bf16.mxu0 0
    %746 = vmatpush1.bf16.msra.mxu0 0
    %747 = vmatprep.subr.bf16.mxu0 0
    %748 = vmatpush1.bf16.msra.mxu0 0
    %749 = vmatprep.subr.bf16.mxu0 0
    %750 = vmatpush1.bf16.msra.mxu0 0
    %751 = vmatprep.subr.bf16.mxu0 0
    %752 = vmatpush1.bf16.msra.mxu0 0
    %753 = vmatprep.subr.bf16.mxu0 0
    %754 = vmatpush1.bf16.msra.mxu0 0
    %755 = vmatprep.subr.bf16.mxu0 0
    %756 = vmatpush1.bf16.msra.mxu0 0
    %757 = vmatprep.subr.bf16.mxu0 0
    %758 = vmatpush1.bf16.msra.mxu0 0
    %759 = vmatprep.subr.bf16.mxu0 0
    %760 = vmatpush1.bf16.msra.mxu0 0
    %761 = vmatprep.subr.bf16.mxu0 0
    %762 = vmatpush1.bf16.msra.mxu0 0
    %763 = vmatprep.mubr.bf16.mxu0 0
    %764 = vmatmul.mubr.bf16.gmra.mrb[0].mxu0 %v729
    %v765 = vpop.f32.mrb[0].mxu0
    %v766 = vadd.f32 0.0, %v765
    %v767 = vpop.f32.mrb[0].mxu0
    %v768 = vpop.f32.mrb[0].mxu0
    %v769 = vpop.f32.mrb[0].mxu0
    %770 = vdwg.mxu0
    %v771 = vadd.f32 %v216, %v766
    %v772 = vmul.f32 %v290, %v771
    %v773 = vtanh.pop %v772
    %v774 = vmul.f32 %v773, 0.5
    %v775 = vadd.f32 %v774, 0.5
    %v776 = vsel %vm289, %v773, %v775
    %v777 = vmul.f32 %v776, %v717
    %779 = vrot.lane.b32.xlu0 %v776, 64
    %v780 = vpop.permute.xlu0 %779
    %v782 = vmul.f32 %v776, %v780
    %784 = vrot.lane.b32.xlu0 %v782, 32
    %v785 = vpop.permute.xlu0 %784
    %v787 = vadd.f32 %v777, %v785
    %v788 = vtanh.pop %v787
    %790 = vrot.lane.b32.xlu0 %v788, 64
    %v791 = vpop.permute.xlu0 %790
    %v793 = vmul.f32 %v776, %v791
    %v794 = vpack.c.bf16 %v793, %v793
    %796 = vrot.lane.b32.xlu0 %v794, 32
    %v797 = vpop.permute.xlu0 %796
    %v799 = vsel %vm307, %v797, 0
    %801 = vmatprep.subr.bf16.mxu0 0
    %802 = vmatpush1.bf16.msra.mxu0 %v303
    %803 = vmatprep.subr.bf16.mxu0 0
    %804 = vmatpush1.bf16.msra.mxu0 %v304
    %805 = vmatprep.subr.bf16.mxu0 0
    %806 = vmatpush1.bf16.msra.mxu0 0
    %807 = vmatprep.subr.bf16.mxu0 0
    %808 = vmatpush1.bf16.msra.mxu0 0
    %809 = vmatprep.subr.bf16.mxu0 0
    %810 = vmatpush1.bf16.msra.mxu0 0
    %811 = vmatprep.subr.bf16.mxu0 0
    %812 = vmatpush1.bf16.msra.mxu0 0
    %813 = vmatprep.subr.bf16.mxu0 0
    %814 = vmatpush1.bf16.msra.mxu0 0
    %815 = vmatprep.subr.bf16.mxu0 0
    %816 = vmatpush1.bf16.msra.mxu0 0
    %817 = vmatprep.subr.bf16.mxu0 0
    %818 = vmatpush1.bf16.msra.mxu0 0
    %819 = vmatprep.subr.bf16.mxu0 0
    %820 = vmatpush1.bf16.msra.mxu0 0
    %821 = vmatprep.subr.bf16.mxu0 0
    %822 = vmatpush1.bf16.msra.mxu0 0
    %823 = vmatprep.subr.bf16.mxu0 0
    %824 = vmatpush1.bf16.msra.mxu0 0
    %825 = vmatprep.subr.bf16.mxu0 0
    %826 = vmatpush1.bf16.msra.mxu0 0
    %827 = vmatprep.subr.bf16.mxu0 0
    %828 = vmatpush1.bf16.msra.mxu0 0
    %829 = vmatprep.subr.bf16.mxu0 0
    %830 = vmatpush1.bf16.msra.mxu0 0
    %831 = vmatprep.subr.bf16.mxu0 0
    %832 = vmatpush1.bf16.msra.mxu0 0
    %833 = vmatprep.mubr.bf16.mxu0 0
    %834 = vmatmul.mubr.bf16.gmra.mrb[0].mxu0 %v799
    %v835 = vpop.f32.mrb[0].mxu0
    %v836 = vadd.f32 0.0, %v835
    %v837 = vpop.f32.mrb[0].mxu0
    %v838 = vpop.f32.mrb[0].mxu0
    %v839 = vpop.f32.mrb[0].mxu0
    %840 = vdwg.mxu0
    %v841 = vadd.f32 %v219, %v836
    %v842 = vmul.f32 %v290, %v841
    %v843 = vtanh.pop %v842
    %v844 = vmul.f32 %v843, 0.5
    %v845 = vadd.f32 %v844, 0.5
    %v846 = vsel %vm289, %v843, %v845
    %v847 = vmul.f32 %v846, %v787
    %849 = vrot.lane.b32.xlu0 %v846, 64
    %v850 = vpop.permute.xlu0 %849
    %v852 = vmul.f32 %v846, %v850
    %854 = vrot.lane.b32.xlu0 %v852, 32
    %v855 = vpop.permute.xlu0 %854
    %v857 = vadd.f32 %v847, %v855
    %v858 = vtanh.pop %v857
    %860 = vrot.lane.b32.xlu0 %v858, 64
    %v861 = vpop.permute.xlu0 %860
    %v863 = vmul.f32 %v846, %v861
    %v864 = vpack.c.bf16 %v863, %v863
    %v865 = vld [vmem:[#allocation6] sm:$0xf]
    %v866 = vld [vmem:[#allocation6 + $0x4] sm:$0xf]
    %v867 = vld [vmem:[#allocation6 + $0x8] sm:$0xf]
    %v868 = vld [vmem:[#allocation6 + $0xc] sm:$0xf]
    %870 = vrot.lane.b32.xlu0 %v864, 32
    %v871 = vpop.permute.xlu0 %870
    %v876 = vunpack.c.l.b16 %v865
    %v877 = vunpack.c.l.b16 %v866
    %v878 = vunpack.c.l.b16 %v867
    %v879 = vunpack.c.l.b16 %v868
    %v880 = vpack.c.b16 %v877, %v876
    %v881 = vpack.c.b16 %v879, %v878
    %v885 = vsel %vm307, %v871, 0
    %887 = vmatprep.subr.bf16.mxu0 0
    %888 = vmatpush1.bf16.msra.mxu0 %v880
    %889 = vmatprep.subr.bf16.mxu0 0
    %890 = vmatpush1.bf16.msra.mxu0 %v881
    %891 = vmatprep.subr.bf16.mxu0 0
    %892 = vmatpush1.bf16.msra.mxu0 0
    %893 = vmatprep.subr.bf16.mxu0 0
    %894 = vmatpush1.bf16.msra.mxu0 0
    %895 = vmatprep.subr.bf16.mxu0 0
    %896 = vmatpush1.bf16.msra.mxu0 0
    %897 = vmatprep.subr.bf16.mxu0 0
    %898 = vmatpush1.bf16.msra.mxu0 0
    %899 = vmatprep.subr.bf16.mxu0 0
    %900 = vmatpush1.bf16.msra.mxu0 0
    %901 = vmatprep.subr.bf16.mxu0 0
    %902 = vmatpush1.bf16.msra.mxu0 0
    %903 = vmatprep.subr.bf16.mxu0 0
    %904 = vmatpush1.bf16.msra.mxu0 0
    %905 = vmatprep.subr.bf16.mxu0 0
    %906 = vmatpush1.bf16.msra.mxu0 0
    %907 = vmatprep.subr.bf16.mxu0 0
    %908 = vmatpush1.bf16.msra.mxu0 0
    %909 = vmatprep.subr.bf16.mxu0 0
    %910 = vmatpush1.bf16.msra.mxu0 0
    %911 = vmatprep.subr.bf16.mxu0 0
    %912 = vmatpush1.bf16.msra.mxu0 0
    %913 = vmatprep.subr.bf16.mxu0 0
    %914 = vmatpush1.bf16.msra.mxu0 0
    %915 = vmatprep.subr.bf16.mxu0 0
    %916 = vmatpush1.bf16.msra.mxu0 0
    %917 = vmatprep.subr.bf16.mxu0 0
    %918 = vmatpush1.bf16.msra.mxu0 0
    %919 = vmatprep.mubr.bf16.mxu0 0
    %920 = vmatmul.mubr.bf16.gmra.mrb[0].mxu0 %v885
    %v921 = vpop.f32.mrb[0].mxu0
    %v922 = vadd.f32 0.0, %v921
    %v923 = vpop.f32.mrb[0].mxu0
    %v924 = vpop.f32.mrb[0].mxu0
    %v925 = vpop.f32.mrb[0].mxu0
    %926 = vdwg.mxu0
    %v927 = vadd.f32 %v280, %v922
    %v928 = vmul.f32 %v927, 0.01
    %v929 = vmax.f32 %v927, %v928
    %v930 = vpack.c.bf16 %v929, %v929
    %v931 = vld [vmem:[%s8] sm:$0xf]
    %v932 = vld [vmem:[%s8 + $0x4] sm:$0xf]
    %v933 = vld [vmem:[%s8 + $0x8] sm:$0xf]
    %v934 = vld [vmem:[%s8 + $0xc] sm:$0xf]
    %v935 = vld [vmem:[%s8 + $0x10] sm:$0xf]
    %v936 = vld [vmem:[%s8 + $0x14] sm:$0xf]
    %v937 = vld [vmem:[%s8 + $0x18] sm:$0xf]
    %v938 = vld [vmem:[%s8 + $0x1c] sm:$0xf]
    %v939 = vld [vmem:[%s8 + $0x20] sm:$0xf]
    %v940 = vld [vmem:[%s8 + $0x24] sm:$0xf]
    %v941 = vld [vmem:[%s8 + $0x28] sm:$0xf]
    %v942 = vld [vmem:[%s8 + $0x2c] sm:$0xf]
    %v943 = vld [vmem:[%s8 + $0x30] sm:$0xf]
    %v944 = vld [vmem:[%s8 + $0x34] sm:$0xf]
    %v945 = vld [vmem:[%s8 + $0x38] sm:$0xf]
    %v946 = vld [vmem:[%s8 + $0x3c] sm:$0xf]
    %v947 = vld [vmem:[#allocation7] sm:$0x1]
    %v949 = vlaneseq
    %v950 = vshrl.u32 %v949, 7
    %v951 = vsub.s32 0, %v950
    %v952 = vrot.slane %v947, %v951
    %v970 = vunpack.c.l.b16 %v931
    %v971 = vunpack.c.l.b16 %v932
    %v972 = vunpack.c.l.b16 %v933
    %v973 = vunpack.c.l.b16 %v934
    %v974 = vunpack.c.l.b16 %v935
    %v975 = vunpack.c.l.b16 %v936
    %v976 = vunpack.c.l.b16 %v937
    %v977 = vunpack.c.l.b16 %v938
    %v978 = vunpack.c.l.b16 %v939
    %v979 = vunpack.c.l.b16 %v940
    %v980 = vunpack.c.l.b16 %v941
    %v981 = vunpack.c.l.b16 %v942
    %v982 = vunpack.c.l.b16 %v943
    %v983 = vunpack.c.l.b16 %v944
    %v984 = vunpack.c.l.b16 %v945
    %v985 = vunpack.c.l.b16 %v946
    %v986 = vpack.c.b16 %v971, %v970
    %v987 = vpack.c.b16 %v973, %v972
    %v988 = vpack.c.b16 %v975, %v974
    %v989 = vpack.c.b16 %v977, %v976
    %v990 = vpack.c.b16 %v979, %v978
    %v991 = vpack.c.b16 %v981, %v980
    %v992 = vpack.c.b16 %v983, %v982
    %v993 = vpack.c.b16 %v985, %v984
    %1002 = vmatprep.subr.bf16.mxu0 0
    %1003 = vmatpush1.bf16.msra.mxu0 %v986
    %1004 = vmatprep.subr.bf16.mxu0 0
    %1005 = vmatpush1.bf16.msra.mxu0 %v987
    %1006 = vmatprep.subr.bf16.mxu0 0
    %1007 = vmatpush1.bf16.msra.mxu0 %v988
    %1008 = vmatprep.subr.bf16.mxu0 0
    %1009 = vmatpush1.bf16.msra.mxu0 %v989
    %1010 = vmatprep.subr.bf16.mxu0 0
    %1011 = vmatpush1.bf16.msra.mxu0 %v990
    %1012 = vmatprep.subr.bf16.mxu0 0
    %1013 = vmatpush1.bf16.msra.mxu0 %v991
    %1014 = vmatprep.subr.bf16.mxu0 0
    %1015 = vmatpush1.bf16.msra.mxu0 %v992
    %1016 = vmatprep.subr.bf16.mxu0 0
    %1017 = vmatpush1.bf16.msra.mxu0 %v993
    %1018 = vmatprep.subr.bf16.mxu0 0
    %1019 = vmatpush1.bf16.msra.mxu0 0
    %1020 = vmatprep.subr.bf16.mxu0 0
    %1021 = vmatpush1.bf16.msra.mxu0 0
    %1022 = vmatprep.subr.bf16.mxu0 0
    %1023 = vmatpush1.bf16.msra.mxu0 0
    %1024 = vmatprep.subr.bf16.mxu0 0
    %1025 = vmatpush1.bf16.msra.mxu0 0
    %1026 = vmatprep.subr.bf16.mxu0 0
    %1027 = vmatpush1.bf16.msra.mxu0 0
    %1028 = vmatprep.subr.bf16.mxu0 0
    %1029 = vmatpush1.bf16.msra.mxu0 0
    %1030 = vmatprep.subr.bf16.mxu0 0
    %1031 = vmatpush1.bf16.msra.mxu0 0
    %1032 = vmatprep.subr.bf16.mxu0 0
    %1033 = vmatpush1.bf16.msra.mxu0 0
    %1034 = vmatprep.mubr.bf16.mxu0 0
    %1035 = vmatmul.mubr.bf16.gmra.mrb[0].mxu0 %v930
    %v1036 = vpop.f32.mrb[0].mxu0
    %v1037 = vadd.f32 %v952, %v1036
    %v1038 = vpop.f32.mrb[0].mxu0
    %v1039 = vpop.f32.mrb[0].mxu0
    %v1040 = vpop.f32.mrb[0].mxu0
    %1041 = vdwg.mxu0
    %v1042 = vmul.f32 %v1037, 0.01
    %v1043 = vmax.f32 %v1037, %v1042
    %v1044 = vpack.c.bf16 %v1043, %v1043
    %v1045 = vld [vmem:[%s10] sm:$0xf]
    %v1046 = vld [vmem:[%s10 + $0x4] sm:$0xf]
    %v1047 = vld [vmem:[%s10 + $0x8] sm:$0xf]
    %v1048 = vld [vmem:[%s10 + $0xc] sm:$0xf]
    %v1049 = vld [vmem:[%s10 + $0x10] sm:$0xf]
    %v1050 = vld [vmem:[%s10 + $0x14] sm:$0xf]
    %v1051 = vld [vmem:[%s10 + $0x18] sm:$0xf]
    %v1052 = vld [vmem:[%s10 + $0x1c] sm:$0xf]
    %v1053 = vld [vmem:[%s10 + $0x20] sm:$0xf]
    %v1054 = vld [vmem:[%s10 + $0x24] sm:$0xf]
    %v1055 = vld [vmem:[%s10 + $0x28] sm:$0xf]
    %v1056 = vld [vmem:[%s10 + $0x2c] sm:$0xf]
    %v1057 = vld [vmem:[%s10 + $0x30] sm:$0xf]
    %v1058 = vld [vmem:[%s10 + $0x34] sm:$0xf]
    %v1059 = vld [vmem:[%s10 + $0x38] sm:$0xf]
    %v1060 = vld [vmem:[%s10 + $0x3c] sm:$0xf]
    %v1061 = vld [vmem:[#allocation9] sm:$0x1]
    %v1063 = vlaneseq
    %v1064 = vshrl.u32 %v1063, 7
    %v1065 = vsub.s32 0, %v1064
    %v1066 = vrot.slane %v1061, %v1065
    %v1084 = vunpack.c.l.b16 %v1045
    %v1085 = vunpack.c.l.b16 %v1046
    %v1086 = vunpack.c.l.b16 %v1047
    %v1087 = vunpack.c.l.b16 %v1048
    %v1088 = vunpack.c.l.b16 %v1049
    %v1089 = vunpack.c.l.b16 %v1050
    %v1090 = vunpack.c.l.b16 %v1051
    %v1091 = vunpack.c.l.b16 %v1052
    %v1092 = vunpack.c.l.b16 %v1053
    %v1093 = vunpack.c.l.b16 %v1054
    %v1094 = vunpack.c.l.b16 %v1055
    %v1095 = vunpack.c.l.b16 %v1056
    %v1096 = vunpack.c.l.b16 %v1057
    %v1097 = vunpack.c.l.b16 %v1058
    %v1098 = vunpack.c.l.b16 %v1059
    %v1099 = vunpack.c.l.b16 %v1060
    %v1100 = vpack.c.b16 %v1085, %v1084
    %v1101 = vpack.c.b16 %v1087, %v1086
    %v1102 = vpack.c.b16 %v1089, %v1088
    %v1103 = vpack.c.b16 %v1091, %v1090
    %v1104 = vpack.c.b16 %v1093, %v1092
    %v1105 = vpack.c.b16 %v1095, %v1094
    %v1106 = vpack.c.b16 %v1097, %v1096
    %v1107 = vpack.c.b16 %v1099, %v1098
    %1116 = vmatprep.subr.bf16.mxu0 0
    %1117 = vmatpush1.bf16.msra.mxu0 %v1100
    %1118 = vmatprep.subr.bf16.mxu0 0
    %1119 = vmatpush1.bf16.msra.mxu0 %v1101
    %1120 = vmatprep.subr.bf16.mxu0 0
    %1121 = vmatpush1.bf16.msra.mxu0 %v1102
    %1122 = vmatprep.subr.bf16.mxu0 0
    %1123 = vmatpush1.bf16.msra.mxu0 %v1103
    %1124 = vmatprep.subr.bf16.mxu0 0
    %1125 = vmatpush1.bf16.msra.mxu0 %v1104
    %1126 = vmatprep.subr.bf16.mxu0 0
    %1127 = vmatpush1.bf16.msra.mxu0 %v1105
    %1128 = vmatprep.subr.bf16.mxu0 0
    %1129 = vmatpush1.bf16.msra.mxu0 %v1106
    %1130 = vmatprep.subr.bf16.mxu0 0
    %1131 = vmatpush1.bf16.msra.mxu0 %v1107
    %1132 = vmatprep.subr.bf16.mxu0 0
    %1133 = vmatpush1.bf16.msra.mxu0 0
    %1134 = vmatprep.subr.bf16.mxu0 0
    %1135 = vmatpush1.bf16.msra.mxu0 0
    %1136 = vmatprep.subr.bf16.mxu0 0
    %1137 = vmatpush1.bf16.msra.mxu0 0
    %1138 = vmatprep.subr.bf16.mxu0 0
    %1139 = vmatpush1.bf16.msra.mxu0 0
    %1140 = vmatprep.subr.bf16.mxu0 0
    %1141 = vmatpush1.bf16.msra.mxu0 0
    %1142 = vmatprep.subr.bf16.mxu0 0
    %1143 = vmatpush1.bf16.msra.mxu0 0
    %1144 = vmatprep.subr.bf16.mxu0 0
    %1145 = vmatpush1.bf16.msra.mxu0 0
    %1146 = vmatprep.subr.bf16.mxu0 0
    %1147 = vmatpush1.bf16.msra.mxu0 0
    %1148 = vmatprep.mubr.bf16.mxu0 0
    %1149 = vmatmul.mubr.bf16.gmra.mrb[0].mxu0 %v1044
    %v1150 = vpop.f32.mrb[0].mxu0
    %v1151 = vadd.f32 %v1066, %v1150
    %v1152 = vpop.f32.mrb[0].mxu0
    %v1153 = vpop.f32.mrb[0].mxu0
    %v1154 = vpop.f32.mrb[0].mxu0
    %1155 = vdwg.mxu0
    %v1156 = vand.u32 2147483647, %v1151
    %v1157 = vadd.f32 %v1156, 1.0
    %v1158 = vrcp.pop %v1157
    %v1159 = vmul.f32 %v1151, %v1158
    %1160 = vst [vmem:[%s12] sm:$0xff] %v1159
    // Predicated region
    $region70: #{actor_forward.1} parent=1 // pred_check
      _
    $region71: #{actor_forward.1} parent=1 // pred_check_branch
      %1162 = sbr.rel (0) target = $region73
    $region72: #{actor_forward.1} parent=1 // pred_region
      _
    $region73: #{actor_forward.1} parent=1 // pred_fallthru
      _
    // Predicated region
    $region74: #{actor_forward.1} parent=1 // pred_check
      _
    $region75: #{actor_forward.1} parent=1 // pred_check_branch
      %1164 = sbr.rel (0) target = $region77
    $region76: #{actor_forward.1} parent=1 // pred_region
      _
    $region77: #{actor_forward.1} parent=1 // pred_fallthru
      _
    %1165 = vsyncpa [#allocation3], 1
    %1166 = vsyncpa [#allocation5], 1
    %1167 = vsyncpa [#allocation8], 1

</llo_original>
